<compile_context>
chip_gen: v6e
topology: v6e:2x2x1
jax: 0.10.0
libtpu: 0.0.40
codegen_flags: <defaults>
</compile_context>

<pallas_src>
import jax
import jax.numpy as jnp
from jax.experimental import pallas as pl
from jax.experimental.pallas import tpu as pltpu


# ----------------------------------------------------------------------------- kernels
def _make_attn_kernel(TN, K1, C):
    """Fused QKV projection + diagonal-softmax attention + BN partial stats.

    Everything lane-dense: the point tile TN sits on the 128-lane axis throughout.
    """
    C3 = 3 * C

    def attn_kernel(walk_ref, wt_ref, b_ref, pre_ref, stats_ref):
        # walk_ref : (1, K1, C, TN)  neighbor slots, channels-major, TN on lanes
        # wt_ref   : (3C, C)         fused [Wq; Wk; Wv]^T
        # b_ref    : (3C, 1)         fused [bq; bk; bv]
        # pre_ref  : (1, C, TN)      attention output, already in (C, N) layout
        # stats_ref: (1, C, 2)       per-batch BN partial sums (resident over n axis)
        n_idx = pl.program_id(1)

        # ---- fused QKV projection: K1 lane-dense MXU matmuls (K1 small & static) ----
        qs, ks, vs = [], [], []
        for i in range(K1):
            x_i = walk_ref[0, i]                            # (C, TN) major-dim slice
            qkv = jnp.dot(wt_ref[...], x_i,
                          preferred_element_type=jnp.float32) + b_ref[...]
            qs.append(qkv[0:C])                             # (C, TN)
            ks.append(qkv[C:2 * C])                         # (C, TN)
            vs.append(qkv[2 * C:C3])                        # (C, TN)

        # ---- per-row softmax on the fly; only the diagonal term weights V ----
        pre = jnp.zeros((C, TN), jnp.float32)
        for i in range(K1):
            # similarity row i: K1 lane-dense (1, TN) dot products (VPU + sublane reduce)
            row = [jnp.sum(qs[i] * ks[j], axis=0, keepdims=True) for j in range(K1)]
            m = row[0]
            for j in range(1, K1):
                m = jnp.maximum(m, row[j])
            s = jnp.exp(row[0] - m)
            for j in range(1, K1):
                s = s + jnp.exp(row[j] - m)
            diag_attn = jnp.exp(row[i] - m) * pl.reciprocal(s, approx=True)  # (1, TN)
            pre = pre + diag_attn * vs[i]                   # broadcast over C sublanes

        pre_ref[0] = pre                                    # lane-dense (C, TN) store

        # ---- BN partial statistics, accumulated across the N-tile grid axis ----
        psum = jnp.sum(pre, axis=1, keepdims=True)          # (C, 1)
        psq = jnp.sum(pre * pre, axis=1, keepdims=True)     # (C, 1)

        @pl.when(n_idx == 0)
        def _():
            stats_ref[...] = jnp.zeros_like(stats_ref)

        stats_ref[0, :, 0:1] = stats_ref[0, :, 0:1] + psum
        stats_ref[0, :, 1:2] = stats_ref[0, :, 1:2] + psq

    return attn_kernel


def _bn_relu_res_kernel(pre_ref, feat_ref, scale_ref, shift_ref, out_ref):
    """y = relu(pre * scale + shift); out = feature + y   (all in (B, C, N) layout)."""
    y = pre_ref[0] * scale_ref[...] + shift_ref[...]        # (C, TN)
    out_ref[0] = feat_ref[0] + jnp.maximum(y, 0.0)


# ----------------------------------------------------------------------------- tiling
def _vmem_capacity_bytes():
    try:
        info = pltpu.get_tpu_info()
        cap = int(getattr(info, "vmem_capacity_bytes", 0))
        if cap > 0:
            return cap
    except Exception:
        pass
    return 64 * 1024 * 1024        # conservative fallback (v7x-sized VMEM)


def _generation_policy():
    """(vmem_limit_bytes, max point-tile) per TPU generation."""
    cap = _vmem_capacity_bytes()
    if cap <= 64 * 1024 * 1024:                   # v7x-class: 64 MiB / TC, 2 TCs
        return 38 * 1024 * 1024, 256
    return 96 * 1024 * 1024, 1024                 # v5e / v6e: 128 MiB VMEM


def _pick_tile(n, max_tile):
    """Largest tile dividing n that is lane-aligned (multiple of 128) or full-dim."""
    if n <= max_tile:
        return n
    t = (max_tile // 128) * 128
    while t >= 128:
        if n % t == 0:
            return t
        t -= 128
    return n  # fallback: full-dim block (always a legal BlockSpec)


# ----------------------------------------------------------------------------- wrapper
def self_attention_layer(feature_bcn, knn_inds, params):
    """feature_bcn: (B, C, N) float32, knn_inds: (B, N, k) int32 -> (B, C, N) float32."""
    wq, bq, wk, bk, wv, bv, gamma, beta = params
    feature_bcn = feature_bcn.astype(jnp.float32)
    B, C, N = feature_bcn.shape
    k = knn_inds.shape[2]
    K1 = k + 1

    vmem_limit, max_tile = _generation_policy()

    # kernel-1 tile: bounded by the generation cap and a rough VMEM estimate of the
    # double-buffered walk block plus the Q/K/V/sim/exp temporaries (~ bytes/point).
    per_point = 4 * (2 * K1 * C + 3 * K1 * C + 4 * C + 8 * K1)
    TN = _pick_tile(N, min(max_tile, max(128, (vmem_limit // 2) // per_point)))
    NT = N // TN

    # ---- plain-JAX glue: KNN gather + center concat (data-dependent row gather) ----
    # Gathered directly in channels-major (B, K1, C, N) layout -- no padding, no big
    # XLA transpose of the amplified tensor.
    # TODO(synk): an in-kernel gather (scalar-prefetched knn_inds + resident (C, N)
    # slab) would remove this K1x HBM-amplified intermediate entirely.
    center = jnp.arange(N, dtype=knn_inds.dtype)
    idx_full = jnp.concatenate(
        [jnp.transpose(knn_inds, (0, 2, 1)),                         # (B, k,  N)
         jnp.broadcast_to(center[None, None, :], (B, 1, N))],        # (B, 1,  N)
        axis=1)                                                      # (B, K1, N)

    def gather_batch(f_cn, idx_kn):        # (C, N), (K1, N) -> (K1, C, N)
        return jax.vmap(lambda row: jnp.take(f_cn, row, axis=1))(idx_kn)

    walk = jax.vmap(gather_batch)(feature_bcn, idx_full)             # (B, K1, C, N)

    # Fused QKV weight / bias, applied channels-major: qkv = W_t @ x + b.
    w_t = jnp.concatenate([wq.T, wk.T, wv.T], axis=0)                # (3C, C)
    b_all = jnp.concatenate([bq, bk, bv]).reshape(3 * C, 1)          # (3C, 1)

    # ---- kernel 1: fused QKV + diagonal-softmax attention + BN partial sums ----
    # Grid: B parallel (megacore / v7x 2-TC sharding), N-tiles "arbitrary" so the
    # (1, C, 2) stats block stays resident and accumulates across n.
    pre_t, stats = pl.pallas_call(
        _make_attn_kernel(TN, K1, C),
        out_shape=(jax.ShapeDtypeStruct((B, C, N), jnp.float32),
                   jax.ShapeDtypeStruct((B, C, 2), jnp.float32)),
        grid=(B, NT),
        in_specs=[
            pl.BlockSpec((1, K1, C, TN), lambda b, n: (b, 0, 0, n)),
            pl.BlockSpec((3 * C, C), lambda b, n: (0, 0)),
            pl.BlockSpec((3 * C, 1), lambda b, n: (0, 0)),
        ],
        out_specs=(pl.BlockSpec((1, C, TN), lambda b, n: (b, 0, n)),
                   pl.BlockSpec((1, C, 2), lambda b, n: (b, 0, 0))),
        compiler_params=pltpu.CompilerParams(
            dimension_semantics=("parallel", "arbitrary"),
            vmem_limit_bytes=vmem_limit),
    )(walk, w_t, b_all)

    # ---- tiny scalar glue: fold partial sums into training-mode BN scale/shift ----
    tot = jnp.sum(stats, axis=0)                                     # (C, 2)
    m = jnp.float32(B * N)
    mean = tot[:, 0] / m
    var = jnp.maximum(tot[:, 1] / m - mean * mean, 0.0)              # biased variance
    inv = jax.lax.rsqrt(var + 1e-5)
    scale = (gamma * inv).reshape(C, 1)
    shift = (beta - mean * gamma * inv).reshape(C, 1)

    # ---- kernel 2: BN normalize + ReLU + residual (streaming, writes in place) ----
    TN2 = _pick_tile(N, max(128, (vmem_limit // 2) // (24 * C)))
    NT2 = N // TN2
    out = pl.pallas_call(
        _bn_relu_res_kernel,
        out_shape=jax.ShapeDtypeStruct((B, C, N), jnp.float32),
        grid=(B, NT2),
        in_specs=[
            pl.BlockSpec((1, C, TN2), lambda b, n: (b, 0, n)),
            pl.BlockSpec((1, C, TN2), lambda b, n: (b, 0, n)),
            pl.BlockSpec((C, 1), lambda b, n: (0, 0)),
            pl.BlockSpec((C, 1), lambda b, n: (0, 0)),
        ],
        out_specs=pl.BlockSpec((1, C, TN2), lambda b, n: (b, 0, n)),
        input_output_aliases={0: 0},               # reuse pre_t's HBM buffer
        compiler_params=pltpu.CompilerParams(
            dimension_semantics=("parallel", "parallel"),
            vmem_limit_bytes=vmem_limit),
    )(pre_t, feature_bcn, scale, shift)

    return out                                                       # (B, C, N)


# ----------------------------------------------------------------------------- reference
def reference(feature_bcn, knn_inds, params, eps=1e-5):
    """Pure-JAX replica of the PyTorch forward (training-mode BN, diag einsum)."""
    wq, bq, wk, bk, wv, bv, gamma, beta = params
    B, C, N = feature_bcn.shape
    hi = jax.lax.Precision.HIGHEST
    f_bnc = jnp.transpose(feature_bcn, (0, 2, 1))
    gathered = jax.vmap(lambda f, idx: f[idx])(f_bnc, knn_inds)
    walk = jnp.concatenate([gathered, f_bnc[:, :, None, :]], axis=2)     # (B, N, K1, C)
    Q = jnp.einsum('bnkc,cd->bnkd', walk, wq, precision=hi) + bq
    K = jnp.einsum('bnkc,cd->bnkd', walk, wk, precision=hi) + bk
    V = jnp.einsum('bnkc,cd->bnkd', walk, wv, precision=hi) + bv
    sim = jnp.einsum('bnic,bnjc->bnij', Q, K, precision=hi)
    attn = jax.nn.softmax(sim, axis=-1)
    diag = jnp.einsum('bnii->bni', attn)                                 # diagonal
    x = jnp.einsum('bni,bnic->bnc', diag, V, precision=hi)               # (B, N, C)
    x2 = x.reshape(B * N, C)
    mean = x2.mean(axis=0)
    var = ((x2 - mean) ** 2).mean(axis=0)
    y = (x2 - mean) / jnp.sqrt(var + eps) * gamma + beta
    y = jnp.maximum(y, 0.0)
    out = f_bnc.reshape(B * N, C) + y
    return jnp.transpose(out.reshape(B, N, C), (0, 2, 1))


# ----------------------------------------------------------------------------- main
if __name__ == "__main__":
    B, C, N, k = 2, 8, 16, 4

    key = jax.random.PRNGKey(0)
    kf, ki, k1, k2, k3, k4, k5, k6 = jax.random.split(key, 8)

    feature = jax.random.normal(kf, (B, C, N), dtype=jnp.float32)        # PyTorch layout (B, C, N)
    knn_inds = jax.random.randint(ki, (B, N, k), 0, N, dtype=jnp.int32)

    # Weights applied as x @ W + b (same function family as nn.Linear with W_pt = W.T).
    s = 0.3
    params = (
        s * jax.random.normal(k1, (C, C), dtype=jnp.float32),   # Wq
        s * jax.random.normal(k2, (C,), dtype=jnp.float32),     # bq
        s * jax.random.normal(k3, (C, C), dtype=jnp.float32),   # Wk
        s * jax.random.normal(k4, (C,), dtype=jnp.float32),     # bk
        s * jax.random.normal(k5, (C, C), dtype=jnp.float32),   # Wv
        s * jax.random.normal(k6, (C,), dtype=jnp.float32),     # bv
        jnp.ones((C,), dtype=jnp.float32),                      # BN gamma (default init)
        jnp.zeros((C,), dtype=jnp.float32),                     # BN beta  (default init)
    )

    out = jax.block_until_ready(self_attention_layer(feature, knn_inds, params))
    ref = jax.block_until_ready(reference(feature, knn_inds, params))

    assert out.shape == (B, C, N)
    max_err = float(jnp.max(jnp.abs(out - ref)))
    assert max_err < 1e-2, f"mismatch vs reference, max abs err = {max_err}"

    print("KERNEL_OK")
</pallas_src>

<mosaic_0001>
module attributes {stable_mosaic.version = 11 : i64} {
  func.func @attn_kernel(%arg0: i32, %arg1: i32, %arg2: memref<1x5x8x16xf32, #tpu.memory_space<vmem>>, %arg3: memref<24x8xf32, #tpu.memory_space<vmem>>, %arg4: memref<24x1xf32, #tpu.memory_space<vmem>>, %arg5: memref<1x8x16xf32, #tpu.memory_space<vmem>>, %arg6: memref<1x8x2xf32, #tpu.memory_space<vmem>>) attributes {dimension_semantics = [#tpu.dimension_semantics<parallel>, #tpu.dimension_semantics<arbitrary>], iteration_bounds = array<i64: 2, 1>, scalar_prefetch = 0 : i64, scratch_operands = 0 : i64, tpu.core_type = #tpu.core_type<tc>, window_params = [{transform_indices = @transform_0, window_bounds = array<i64: 1, 5, 8, 16>}, {pipeline_mode = #tpu.pipeline_mode<synchronous>, transform_indices = @transform_1, window_bounds = array<i64: 24, 8>}, {pipeline_mode = #tpu.pipeline_mode<synchronous>, transform_indices = @transform_2, window_bounds = array<i64: 24, 1>}, {transform_indices = @transform_3, window_bounds = array<i64: 1, 8, 16>}, {transform_indices = @transform_4, window_bounds = array<i64: 1, 8, 2>}]} {
    %c0 = arith.constant 0 : index
    %c0_0 = arith.constant 0 : index
    %c0_1 = arith.constant 0 : index
    %c0_2 = arith.constant 0 : index
    %0 = vector.load %arg2[%c0, %c0_0, %c0_1, %c0_2] : memref<1x5x8x16xf32, #tpu.memory_space<vmem>>, vector<1x1x8x16xf32>
    %1 = vector.shape_cast %0 : vector<1x1x8x16xf32> to vector<8x16xf32>
    %c0_3 = arith.constant 0 : index
    %c0_4 = arith.constant 0 : index
    %2 = vector.load %arg3[%c0_3, %c0_4] : memref<24x8xf32, #tpu.memory_space<vmem>>, vector<24x8xf32>
    %cst = arith.constant dense<0.000000e+00> : vector<24x16xf32>
    %3 = tpu.matmul %2, %1, %cst {dimension_numbers = #tpu.dot_dimension_numbers<[1], [0], [0], [1], [0, 0, 1, 1], [], []>} : vector<24x8xf32>, vector<8x16xf32>, vector<24x16xf32> -> vector<24x16xf32>
    %c0_5 = arith.constant 0 : index
    %c0_6 = arith.constant 0 : index
    %4 = vector.load %arg4[%c0_5, %c0_6] : memref<24x1xf32, #tpu.memory_space<vmem>>, vector<24x1xf32>
    %5 = vector.broadcast %4 : vector<24x1xf32> to vector<24x16xf32>
    %6 = arith.addf %3, %5 : vector<24x16xf32>
    %7 = vector.extract_strided_slice %6 {offsets = [0, 0], sizes = [8, 16], strides = [1, 1]} : vector<24x16xf32> to vector<8x16xf32>
    %8 = vector.extract_strided_slice %6 {offsets = [8, 0], sizes = [8, 16], strides = [1, 1]} : vector<24x16xf32> to vector<8x16xf32>
    %9 = vector.extract_strided_slice %6 {offsets = [16, 0], sizes = [8, 16], strides = [1, 1]} : vector<24x16xf32> to vector<8x16xf32>
    %c0_7 = arith.constant 0 : index
    %c1 = arith.constant 1 : index
    %c0_8 = arith.constant 0 : index
    %c0_9 = arith.constant 0 : index
    %10 = vector.load %arg2[%c0_7, %c1, %c0_8, %c0_9] : memref<1x5x8x16xf32, #tpu.memory_space<vmem>>, vector<1x1x8x16xf32>
    %11 = vector.shape_cast %10 : vector<1x1x8x16xf32> to vector<8x16xf32>
    %c0_10 = arith.constant 0 : index
    %c0_11 = arith.constant 0 : index
    %12 = vector.load %arg3[%c0_10, %c0_11] : memref<24x8xf32, #tpu.memory_space<vmem>>, vector<24x8xf32>
    %cst_12 = arith.constant dense<0.000000e+00> : vector<24x16xf32>
    %13 = tpu.matmul %12, %11, %cst_12 {dimension_numbers = #tpu.dot_dimension_numbers<[1], [0], [0], [1], [0, 0, 1, 1], [], []>} : vector<24x8xf32>, vector<8x16xf32>, vector<24x16xf32> -> vector<24x16xf32>
    %c0_13 = arith.constant 0 : index
    %c0_14 = arith.constant 0 : index
    %14 = vector.load %arg4[%c0_13, %c0_14] : memref<24x1xf32, #tpu.memory_space<vmem>>, vector<24x1xf32>
    %15 = vector.broadcast %14 : vector<24x1xf32> to vector<24x16xf32>
    %16 = arith.addf %13, %15 : vector<24x16xf32>
    %17 = vector.extract_strided_slice %16 {offsets = [0, 0], sizes = [8, 16], strides = [1, 1]} : vector<24x16xf32> to vector<8x16xf32>
    %18 = vector.extract_strided_slice %16 {offsets = [8, 0], sizes = [8, 16], strides = [1, 1]} : vector<24x16xf32> to vector<8x16xf32>
    %19 = vector.extract_strided_slice %16 {offsets = [16, 0], sizes = [8, 16], strides = [1, 1]} : vector<24x16xf32> to vector<8x16xf32>
    %c0_15 = arith.constant 0 : index
    %c2 = arith.constant 2 : index
    %c0_16 = arith.constant 0 : index
    %c0_17 = arith.constant 0 : index
    %20 = vector.load %arg2[%c0_15, %c2, %c0_16, %c0_17] : memref<1x5x8x16xf32, #tpu.memory_space<vmem>>, vector<1x1x8x16xf32>
    %21 = vector.shape_cast %20 : vector<1x1x8x16xf32> to vector<8x16xf32>
    %c0_18 = arith.constant 0 : index
    %c0_19 = arith.constant 0 : index
    %22 = vector.load %arg3[%c0_18, %c0_19] : memref<24x8xf32, #tpu.memory_space<vmem>>, vector<24x8xf32>
    %cst_20 = arith.constant dense<0.000000e+00> : vector<24x16xf32>
    %23 = tpu.matmul %22, %21, %cst_20 {dimension_numbers = #tpu.dot_dimension_numbers<[1], [0], [0], [1], [0, 0, 1, 1], [], []>} : vector<24x8xf32>, vector<8x16xf32>, vector<24x16xf32> -> vector<24x16xf32>
    %c0_21 = arith.constant 0 : index
    %c0_22 = arith.constant 0 : index
    %24 = vector.load %arg4[%c0_21, %c0_22] : memref<24x1xf32, #tpu.memory_space<vmem>>, vector<24x1xf32>
    %25 = vector.broadcast %24 : vector<24x1xf32> to vector<24x16xf32>
    %26 = arith.addf %23, %25 : vector<24x16xf32>
    %27 = vector.extract_strided_slice %26 {offsets = [0, 0], sizes = [8, 16], strides = [1, 1]} : vector<24x16xf32> to vector<8x16xf32>
    %28 = vector.extract_strided_slice %26 {offsets = [8, 0], sizes = [8, 16], strides = [1, 1]} : vector<24x16xf32> to vector<8x16xf32>
    %29 = vector.extract_strided_slice %26 {offsets = [16, 0], sizes = [8, 16], strides = [1, 1]} : vector<24x16xf32> to vector<8x16xf32>
    %c0_23 = arith.constant 0 : index
    %c3 = arith.constant 3 : index
    %c0_24 = arith.constant 0 : index
    %c0_25 = arith.constant 0 : index
    %30 = vector.load %arg2[%c0_23, %c3, %c0_24, %c0_25] : memref<1x5x8x16xf32, #tpu.memory_space<vmem>>, vector<1x1x8x16xf32>
    %31 = vector.shape_cast %30 : vector<1x1x8x16xf32> to vector<8x16xf32>
    %c0_26 = arith.constant 0 : index
    %c0_27 = arith.constant 0 : index
    %32 = vector.load %arg3[%c0_26, %c0_27] : memref<24x8xf32, #tpu.memory_space<vmem>>, vector<24x8xf32>
    %cst_28 = arith.constant dense<0.000000e+00> : vector<24x16xf32>
    %33 = tpu.matmul %32, %31, %cst_28 {dimension_numbers = #tpu.dot_dimension_numbers<[1], [0], [0], [1], [0, 0, 1, 1], [], []>} : vector<24x8xf32>, vector<8x16xf32>, vector<24x16xf32> -> vector<24x16xf32>
    %c0_29 = arith.constant 0 : index
    %c0_30 = arith.constant 0 : index
    %34 = vector.load %arg4[%c0_29, %c0_30] : memref<24x1xf32, #tpu.memory_space<vmem>>, vector<24x1xf32>
    %35 = vector.broadcast %34 : vector<24x1xf32> to vector<24x16xf32>
    %36 = arith.addf %33, %35 : vector<24x16xf32>
    %37 = vector.extract_strided_slice %36 {offsets = [0, 0], sizes = [8, 16], strides = [1, 1]} : vector<24x16xf32> to vector<8x16xf32>
    %38 = vector.extract_strided_slice %36 {offsets = [8, 0], sizes = [8, 16], strides = [1, 1]} : vector<24x16xf32> to vector<8x16xf32>
    %39 = vector.extract_strided_slice %36 {offsets = [16, 0], sizes = [8, 16], strides = [1, 1]} : vector<24x16xf32> to vector<8x16xf32>
    %c0_31 = arith.constant 0 : index
    %c4 = arith.constant 4 : index
    %c0_32 = arith.constant 0 : index
    %c0_33 = arith.constant 0 : index
    %40 = vector.load %arg2[%c0_31, %c4, %c0_32, %c0_33] : memref<1x5x8x16xf32, #tpu.memory_space<vmem>>, vector<1x1x8x16xf32>
    %41 = vector.shape_cast %40 : vector<1x1x8x16xf32> to vector<8x16xf32>
    %c0_34 = arith.constant 0 : index
    %c0_35 = arith.constant 0 : index
    %42 = vector.load %arg3[%c0_34, %c0_35] : memref<24x8xf32, #tpu.memory_space<vmem>>, vector<24x8xf32>
    %cst_36 = arith.constant dense<0.000000e+00> : vector<24x16xf32>
    %43 = tpu.matmul %42, %41, %cst_36 {dimension_numbers = #tpu.dot_dimension_numbers<[1], [0], [0], [1], [0, 0, 1, 1], [], []>} : vector<24x8xf32>, vector<8x16xf32>, vector<24x16xf32> -> vector<24x16xf32>
    %c0_37 = arith.constant 0 : index
    %c0_38 = arith.constant 0 : index
    %44 = vector.load %arg4[%c0_37, %c0_38] : memref<24x1xf32, #tpu.memory_space<vmem>>, vector<24x1xf32>
    %45 = vector.broadcast %44 : vector<24x1xf32> to vector<24x16xf32>
    %46 = arith.addf %43, %45 : vector<24x16xf32>
    %47 = vector.extract_strided_slice %46 {offsets = [0, 0], sizes = [8, 16], strides = [1, 1]} : vector<24x16xf32> to vector<8x16xf32>
    %48 = vector.extract_strided_slice %46 {offsets = [8, 0], sizes = [8, 16], strides = [1, 1]} : vector<24x16xf32> to vector<8x16xf32>
    %49 = vector.extract_strided_slice %46 {offsets = [16, 0], sizes = [8, 16], strides = [1, 1]} : vector<24x16xf32> to vector<8x16xf32>
    %cst_39 = arith.constant 0.000000e+00 : f32
    %50 = vector.broadcast %cst_39 : f32 to vector<8x16xf32>
    %51 = arith.mulf %7, %8 : vector<8x16xf32>
    %cst_40 = arith.constant dense<0.000000e+00> : vector<16xf32>
    %52 = vector.multi_reduction <add>, %51, %cst_40 [0] : vector<8x16xf32> to vector<16xf32>
    %53 = vector.shape_cast %52 : vector<16xf32> to vector<1x16xf32>
    %54 = arith.mulf %7, %18 : vector<8x16xf32>
    %cst_41 = arith.constant dense<0.000000e+00> : vector<16xf32>
    %55 = vector.multi_reduction <add>, %54, %cst_41 [0] : vector<8x16xf32> to vector<16xf32>
    %56 = vector.shape_cast %55 : vector<16xf32> to vector<1x16xf32>
    %57 = arith.mulf %7, %28 : vector<8x16xf32>
    %cst_42 = arith.constant dense<0.000000e+00> : vector<16xf32>
    %58 = vector.multi_reduction <add>, %57, %cst_42 [0] : vector<8x16xf32> to vector<16xf32>
    %59 = vector.shape_cast %58 : vector<16xf32> to vector<1x16xf32>
    %60 = arith.mulf %7, %38 : vector<8x16xf32>
    %cst_43 = arith.constant dense<0.000000e+00> : vector<16xf32>
    %61 = vector.multi_reduction <add>, %60, %cst_43 [0] : vector<8x16xf32> to vector<16xf32>
    %62 = vector.shape_cast %61 : vector<16xf32> to vector<1x16xf32>
    %63 = arith.mulf %7, %48 : vector<8x16xf32>
    %cst_44 = arith.constant dense<0.000000e+00> : vector<16xf32>
    %64 = vector.multi_reduction <add>, %63, %cst_44 [0] : vector<8x16xf32> to vector<16xf32>
    %65 = vector.shape_cast %64 : vector<16xf32> to vector<1x16xf32>
    %66 = arith.maximumf %53, %56 : vector<1x16xf32>
    %67 = arith.maximumf %66, %59 : vector<1x16xf32>
    %68 = arith.maximumf %67, %62 : vector<1x16xf32>
    %69 = arith.maximumf %68, %65 : vector<1x16xf32>
    %70 = arith.subf %53, %69 : vector<1x16xf32>
    %71 = math.exp %70 : vector<1x16xf32>
    %72 = arith.subf %56, %69 : vector<1x16xf32>
    %73 = math.exp %72 : vector<1x16xf32>
    %74 = arith.addf %71, %73 : vector<1x16xf32>
    %75 = arith.subf %59, %69 : vector<1x16xf32>
    %76 = math.exp %75 : vector<1x16xf32>
    %77 = arith.addf %74, %76 : vector<1x16xf32>
    %78 = arith.subf %62, %69 : vector<1x16xf32>
    %79 = math.exp %78 : vector<1x16xf32>
    %80 = arith.addf %77, %79 : vector<1x16xf32>
    %81 = arith.subf %65, %69 : vector<1x16xf32>
    %82 = math.exp %81 : vector<1x16xf32>
    %83 = arith.addf %80, %82 : vector<1x16xf32>
    %84 = arith.subf %53, %69 : vector<1x16xf32>
    %85 = math.exp %84 : vector<1x16xf32>
    %86 = tpu.reciprocal %83 {approx = true} : vector<1x16xf32> -> vector<1x16xf32>
    %87 = arith.mulf %85, %86 : vector<1x16xf32>
    %88 = vector.broadcast %87 : vector<1x16xf32> to vector<8x16xf32>
    %89 = arith.mulf %88, %9 : vector<8x16xf32>
    %90 = arith.addf %50, %89 : vector<8x16xf32>
    %91 = arith.mulf %17, %8 : vector<8x16xf32>
    %cst_45 = arith.constant dense<0.000000e+00> : vector<16xf32>
    %92 = vector.multi_reduction <add>, %91, %cst_45 [0] : vector<8x16xf32> to vector<16xf32>
    %93 = vector.shape_cast %92 : vector<16xf32> to vector<1x16xf32>
    %94 = arith.mulf %17, %18 : vector<8x16xf32>
    %cst_46 = arith.constant dense<0.000000e+00> : vector<16xf32>
    %95 = vector.multi_reduction <add>, %94, %cst_46 [0] : vector<8x16xf32> to vector<16xf32>
    %96 = vector.shape_cast %95 : vector<16xf32> to vector<1x16xf32>
    %97 = arith.mulf %17, %28 : vector<8x16xf32>
    %cst_47 = arith.constant dense<0.000000e+00> : vector<16xf32>
    %98 = vector.multi_reduction <add>, %97, %cst_47 [0] : vector<8x16xf32> to vector<16xf32>
    %99 = vector.shape_cast %98 : vector<16xf32> to vector<1x16xf32>
    %100 = arith.mulf %17, %38 : vector<8x16xf32>
    %cst_48 = arith.constant dense<0.000000e+00> : vector<16xf32>
    %101 = vector.multi_reduction <add>, %100, %cst_48 [0] : vector<8x16xf32> to vector<16xf32>
    %102 = vector.shape_cast %101 : vector<16xf32> to vector<1x16xf32>
    %103 = arith.mulf %17, %48 : vector<8x16xf32>
    %cst_49 = arith.constant dense<0.000000e+00> : vector<16xf32>
    %104 = vector.multi_reduction <add>, %103, %cst_49 [0] : vector<8x16xf32> to vector<16xf32>
    %105 = vector.shape_cast %104 : vector<16xf32> to vector<1x16xf32>
    %106 = arith.maximumf %93, %96 : vector<1x16xf32>
    %107 = arith.maximumf %106, %99 : vector<1x16xf32>
    %108 = arith.maximumf %107, %102 : vector<1x16xf32>
    %109 = arith.maximumf %108, %105 : vector<1x16xf32>
    %110 = arith.subf %93, %109 : vector<1x16xf32>
    %111 = math.exp %110 : vector<1x16xf32>
    %112 = arith.subf %96, %109 : vector<1x16xf32>
    %113 = math.exp %112 : vector<1x16xf32>
    %114 = arith.addf %111, %113 : vector<1x16xf32>
    %115 = arith.subf %99, %109 : vector<1x16xf32>
    %116 = math.exp %115 : vector<1x16xf32>
    %117 = arith.addf %114, %116 : vector<1x16xf32>
    %118 = arith.subf %102, %109 : vector<1x16xf32>
    %119 = math.exp %118 : vector<1x16xf32>
    %120 = arith.addf %117, %119 : vector<1x16xf32>
    %121 = arith.subf %105, %109 : vector<1x16xf32>
    %122 = math.exp %121 : vector<1x16xf32>
    %123 = arith.addf %120, %122 : vector<1x16xf32>
    %124 = arith.subf %96, %109 : vector<1x16xf32>
    %125 = math.exp %124 : vector<1x16xf32>
    %126 = tpu.reciprocal %123 {approx = true} : vector<1x16xf32> -> vector<1x16xf32>
    %127 = arith.mulf %125, %126 : vector<1x16xf32>
    %128 = vector.broadcast %127 : vector<1x16xf32> to vector<8x16xf32>
    %129 = arith.mulf %128, %19 : vector<8x16xf32>
    %130 = arith.addf %90, %129 : vector<8x16xf32>
    %131 = arith.mulf %27, %8 : vector<8x16xf32>
    %cst_50 = arith.constant dense<0.000000e+00> : vector<16xf32>
    %132 = vector.multi_reduction <add>, %131, %cst_50 [0] : vector<8x16xf32> to vector<16xf32>
    %133 = vector.shape_cast %132 : vector<16xf32> to vector<1x16xf32>
    %134 = arith.mulf %27, %18 : vector<8x16xf32>
    %cst_51 = arith.constant dense<0.000000e+00> : vector<16xf32>
    %135 = vector.multi_reduction <add>, %134, %cst_51 [0] : vector<8x16xf32> to vector<16xf32>
    %136 = vector.shape_cast %135 : vector<16xf32> to vector<1x16xf32>
    %137 = arith.mulf %27, %28 : vector<8x16xf32>
    %cst_52 = arith.constant dense<0.000000e+00> : vector<16xf32>
    %138 = vector.multi_reduction <add>, %137, %cst_52 [0] : vector<8x16xf32> to vector<16xf32>
    %139 = vector.shape_cast %138 : vector<16xf32> to vector<1x16xf32>
    %140 = arith.mulf %27, %38 : vector<8x16xf32>
    %cst_53 = arith.constant dense<0.000000e+00> : vector<16xf32>
    %141 = vector.multi_reduction <add>, %140, %cst_53 [0] : vector<8x16xf32> to vector<16xf32>
    %142 = vector.shape_cast %141 : vector<16xf32> to vector<1x16xf32>
    %143 = arith.mulf %27, %48 : vector<8x16xf32>
    %cst_54 = arith.constant dense<0.000000e+00> : vector<16xf32>
    %144 = vector.multi_reduction <add>, %143, %cst_54 [0] : vector<8x16xf32> to vector<16xf32>
    %145 = vector.shape_cast %144 : vector<16xf32> to vector<1x16xf32>
    %146 = arith.maximumf %133, %136 : vector<1x16xf32>
    %147 = arith.maximumf %146, %139 : vector<1x16xf32>
    %148 = arith.maximumf %147, %142 : vector<1x16xf32>
    %149 = arith.maximumf %148, %145 : vector<1x16xf32>
    %150 = arith.subf %133, %149 : vector<1x16xf32>
    %151 = math.exp %150 : vector<1x16xf32>
    %152 = arith.subf %136, %149 : vector<1x16xf32>
    %153 = math.exp %152 : vector<1x16xf32>
    %154 = arith.addf %151, %153 : vector<1x16xf32>
    %155 = arith.subf %139, %149 : vector<1x16xf32>
    %156 = math.exp %155 : vector<1x16xf32>
    %157 = arith.addf %154, %156 : vector<1x16xf32>
    %158 = arith.subf %142, %149 : vector<1x16xf32>
    %159 = math.exp %158 : vector<1x16xf32>
    %160 = arith.addf %157, %159 : vector<1x16xf32>
    %161 = arith.subf %145, %149 : vector<1x16xf32>
    %162 = math.exp %161 : vector<1x16xf32>
    %163 = arith.addf %160, %162 : vector<1x16xf32>
    %164 = arith.subf %139, %149 : vector<1x16xf32>
    %165 = math.exp %164 : vector<1x16xf32>
    %166 = tpu.reciprocal %163 {approx = true} : vector<1x16xf32> -> vector<1x16xf32>
    %167 = arith.mulf %165, %166 : vector<1x16xf32>
    %168 = vector.broadcast %167 : vector<1x16xf32> to vector<8x16xf32>
    %169 = arith.mulf %168, %29 : vector<8x16xf32>
    %170 = arith.addf %130, %169 : vector<8x16xf32>
    %171 = arith.mulf %37, %8 : vector<8x16xf32>
    %cst_55 = arith.constant dense<0.000000e+00> : vector<16xf32>
    %172 = vector.multi_reduction <add>, %171, %cst_55 [0] : vector<8x16xf32> to vector<16xf32>
    %173 = vector.shape_cast %172 : vector<16xf32> to vector<1x16xf32>
    %174 = arith.mulf %37, %18 : vector<8x16xf32>
    %cst_56 = arith.constant dense<0.000000e+00> : vector<16xf32>
    %175 = vector.multi_reduction <add>, %174, %cst_56 [0] : vector<8x16xf32> to vector<16xf32>
    %176 = vector.shape_cast %175 : vector<16xf32> to vector<1x16xf32>
    %177 = arith.mulf %37, %28 : vector<8x16xf32>
    %cst_57 = arith.constant dense<0.000000e+00> : vector<16xf32>
    %178 = vector.multi_reduction <add>, %177, %cst_57 [0] : vector<8x16xf32> to vector<16xf32>
    %179 = vector.shape_cast %178 : vector<16xf32> to vector<1x16xf32>
    %180 = arith.mulf %37, %38 : vector<8x16xf32>
    %cst_58 = arith.constant dense<0.000000e+00> : vector<16xf32>
    %181 = vector.multi_reduction <add>, %180, %cst_58 [0] : vector<8x16xf32> to vector<16xf32>
    %182 = vector.shape_cast %181 : vector<16xf32> to vector<1x16xf32>
    %183 = arith.mulf %37, %48 : vector<8x16xf32>
    %cst_59 = arith.constant dense<0.000000e+00> : vector<16xf32>
    %184 = vector.multi_reduction <add>, %183, %cst_59 [0] : vector<8x16xf32> to vector<16xf32>
    %185 = vector.shape_cast %184 : vector<16xf32> to vector<1x16xf32>
    %186 = arith.maximumf %173, %176 : vector<1x16xf32>
    %187 = arith.maximumf %186, %179 : vector<1x16xf32>
    %188 = arith.maximumf %187, %182 : vector<1x16xf32>
    %189 = arith.maximumf %188, %185 : vector<1x16xf32>
    %190 = arith.subf %173, %189 : vector<1x16xf32>
    %191 = math.exp %190 : vector<1x16xf32>
    %192 = arith.subf %176, %189 : vector<1x16xf32>
    %193 = math.exp %192 : vector<1x16xf32>
    %194 = arith.addf %191, %193 : vector<1x16xf32>
    %195 = arith.subf %179, %189 : vector<1x16xf32>
    %196 = math.exp %195 : vector<1x16xf32>
    %197 = arith.addf %194, %196 : vector<1x16xf32>
    %198 = arith.subf %182, %189 : vector<1x16xf32>
    %199 = math.exp %198 : vector<1x16xf32>
    %200 = arith.addf %197, %199 : vector<1x16xf32>
    %201 = arith.subf %185, %189 : vector<1x16xf32>
    %202 = math.exp %201 : vector<1x16xf32>
    %203 = arith.addf %200, %202 : vector<1x16xf32>
    %204 = arith.subf %182, %189 : vector<1x16xf32>
    %205 = math.exp %204 : vector<1x16xf32>
    %206 = tpu.reciprocal %203 {approx = true} : vector<1x16xf32> -> vector<1x16xf32>
    %207 = arith.mulf %205, %206 : vector<1x16xf32>
    %208 = vector.broadcast %207 : vector<1x16xf32> to vector<8x16xf32>
    %209 = arith.mulf %208, %39 : vector<8x16xf32>
    %210 = arith.addf %170, %209 : vector<8x16xf32>
    %211 = arith.mulf %47, %8 : vector<8x16xf32>
    %cst_60 = arith.constant dense<0.000000e+00> : vector<16xf32>
    %212 = vector.multi_reduction <add>, %211, %cst_60 [0] : vector<8x16xf32> to vector<16xf32>
    %213 = vector.shape_cast %212 : vector<16xf32> to vector<1x16xf32>
    %214 = arith.mulf %47, %18 : vector<8x16xf32>
    %cst_61 = arith.constant dense<0.000000e+00> : vector<16xf32>
    %215 = vector.multi_reduction <add>, %214, %cst_61 [0] : vector<8x16xf32> to vector<16xf32>
    %216 = vector.shape_cast %215 : vector<16xf32> to vector<1x16xf32>
    %217 = arith.mulf %47, %28 : vector<8x16xf32>
    %cst_62 = arith.constant dense<0.000000e+00> : vector<16xf32>
    %218 = vector.multi_reduction <add>, %217, %cst_62 [0] : vector<8x16xf32> to vector<16xf32>
    %219 = vector.shape_cast %218 : vector<16xf32> to vector<1x16xf32>
    %220 = arith.mulf %47, %38 : vector<8x16xf32>
    %cst_63 = arith.constant dense<0.000000e+00> : vector<16xf32>
    %221 = vector.multi_reduction <add>, %220, %cst_63 [0] : vector<8x16xf32> to vector<16xf32>
    %222 = vector.shape_cast %221 : vector<16xf32> to vector<1x16xf32>
    %223 = arith.mulf %47, %48 : vector<8x16xf32>
    %cst_64 = arith.constant dense<0.000000e+00> : vector<16xf32>
    %224 = vector.multi_reduction <add>, %223, %cst_64 [0] : vector<8x16xf32> to vector<16xf32>
    %225 = vector.shape_cast %224 : vector<16xf32> to vector<1x16xf32>
    %226 = arith.maximumf %213, %216 : vector<1x16xf32>
    %227 = arith.maximumf %226, %219 : vector<1x16xf32>
    %228 = arith.maximumf %227, %222 : vector<1x16xf32>
    %229 = arith.maximumf %228, %225 : vector<1x16xf32>
    %230 = arith.subf %213, %229 : vector<1x16xf32>
    %231 = math.exp %230 : vector<1x16xf32>
    %232 = arith.subf %216, %229 : vector<1x16xf32>
    %233 = math.exp %232 : vector<1x16xf32>
    %234 = arith.addf %231, %233 : vector<1x16xf32>
    %235 = arith.subf %219, %229 : vector<1x16xf32>
    %236 = math.exp %235 : vector<1x16xf32>
    %237 = arith.addf %234, %236 : vector<1x16xf32>
    %238 = arith.subf %222, %229 : vector<1x16xf32>
    %239 = math.exp %238 : vector<1x16xf32>
    %240 = arith.addf %237, %239 : vector<1x16xf32>
    %241 = arith.subf %225, %229 : vector<1x16xf32>
    %242 = math.exp %241 : vector<1x16xf32>
    %243 = arith.addf %240, %242 : vector<1x16xf32>
    %244 = arith.subf %225, %229 : vector<1x16xf32>
    %245 = math.exp %244 : vector<1x16xf32>
    %246 = tpu.reciprocal %243 {approx = true} : vector<1x16xf32> -> vector<1x16xf32>
    %247 = arith.mulf %245, %246 : vector<1x16xf32>
    %248 = vector.broadcast %247 : vector<1x16xf32> to vector<8x16xf32>
    %249 = arith.mulf %248, %49 : vector<8x16xf32>
    %250 = arith.addf %210, %249 : vector<8x16xf32>
    %c0_65 = arith.constant 0 : index
    %c0_66 = arith.constant 0 : index
    %c0_67 = arith.constant 0 : index
    %251 = vector.load %arg5[%c0_65, %c0_66, %c0_67] : memref<1x8x16xf32, #tpu.memory_space<vmem>>, vector<1x8x16xf32>
    %252 = vector.shape_cast %251 : vector<1x8x16xf32> to vector<8x16xf32>
    %253 = vector.shape_cast %250 : vector<8x16xf32> to vector<1x8x16xf32>
    tpu.vector_store %arg5[%c0_65, %c0_66, %c0_67], %253 {strides = array<i32>} : memref<1x8x16xf32, #tpu.memory_space<vmem>>, vector<1x8x16xf32>,
    %cst_68 = arith.constant dense<0.000000e+00> : vector<8xf32>
    %254 = vector.multi_reduction <add>, %250, %cst_68 [1] : vector<8x16xf32> to vector<8xf32>
    %255 = vector.shape_cast %254 : vector<8xf32> to vector<8x1xf32>
    %256 = arith.mulf %250, %250 : vector<8x16xf32>
    %cst_69 = arith.constant dense<0.000000e+00> : vector<8xf32>
    %257 = vector.multi_reduction <add>, %256, %cst_69 [1] : vector<8x16xf32> to vector<8xf32>
    %258 = vector.shape_cast %257 : vector<8xf32> to vector<8x1xf32>
    %c0_i32 = arith.constant 0 : i32
    %259 = arith.cmpi eq, %arg1, %c0_i32 : i32
    %260 = arith.extui %259 : i1 to i32
    %c0_i32_70 = arith.constant 0 : i32
    %261 = arith.cmpi ne, %260, %c0_i32_70 : i32
    scf.if %261 {
      %cst_83 = arith.constant 0.000000e+00 : f32
      %274 = vector.broadcast %cst_83 : f32 to vector<1x8x2xf32>
      %c0_84 = arith.constant 0 : index
      %c0_85 = arith.constant 0 : index
      %c0_86 = arith.constant 0 : index
      %275 = vector.load %arg6[%c0_84, %c0_85, %c0_86] : memref<1x8x2xf32, #tpu.memory_space<vmem>>, vector<1x8x2xf32>
      tpu.vector_store %arg6[%c0_84, %c0_85, %c0_86], %274 {strides = array<i32>} : memref<1x8x2xf32, #tpu.memory_space<vmem>>, vector<1x8x2xf32>,
    } else {
    }
    %c0_71 = arith.constant 0 : index
    %c0_72 = arith.constant 0 : index
    %c0_73 = arith.constant 0 : index
    %262 = vector.load %arg6[%c0_71, %c0_72, %c0_73] : memref<1x8x2xf32, #tpu.memory_space<vmem>>, vector<1x8x1xf32>
    %263 = vector.shape_cast %262 : vector<1x8x1xf32> to vector<8x1xf32>
    %264 = arith.addf %263, %255 : vector<8x1xf32>
    %c0_74 = arith.constant 0 : index
    %c0_75 = arith.constant 0 : index
    %c0_76 = arith.constant 0 : index
    %265 = vector.load %arg6[%c0_74, %c0_75, %c0_76] : memref<1x8x2xf32, #tpu.memory_space<vmem>>, vector<1x8x1xf32>
    %266 = vector.shape_cast %265 : vector<1x8x1xf32> to vector<8x1xf32>
    %267 = vector.shape_cast %264 : vector<8x1xf32> to vector<1x8x1xf32>
    tpu.vector_store %arg6[%c0_74, %c0_75, %c0_76], %267 {strides = array<i32>} : memref<1x8x2xf32, #tpu.memory_space<vmem>>, vector<1x8x1xf32>,
    %c0_77 = arith.constant 0 : index
    %c0_78 = arith.constant 0 : index
    %c1_79 = arith.constant 1 : index
    %268 = vector.load %arg6[%c0_77, %c0_78, %c1_79] : memref<1x8x2xf32, #tpu.memory_space<vmem>>, vector<1x8x1xf32>
    %269 = vector.shape_cast %268 : vector<1x8x1xf32> to vector<8x1xf32>
    %270 = arith.addf %269, %258 : vector<8x1xf32>
    %c0_80 = arith.constant 0 : index
    %c0_81 = arith.constant 0 : index
    %c1_82 = arith.constant 1 : index
    %271 = vector.load %arg6[%c0_80, %c0_81, %c1_82] : memref<1x8x2xf32, #tpu.memory_space<vmem>>, vector<1x8x1xf32>
    %272 = vector.shape_cast %271 : vector<1x8x1xf32> to vector<8x1xf32>
    %273 = vector.shape_cast %270 : vector<8x1xf32> to vector<1x8x1xf32>
    tpu.vector_store %arg6[%c0_80, %c0_81, %c1_82], %273 {strides = array<i32>} : memref<1x8x2xf32, #tpu.memory_space<vmem>>, vector<1x8x1xf32>,
    return
  }
  func.func @transform_0(%arg0: i32, %arg1: i32) -> (i32, i32, i32, i32) {
    %c0_i32 = arith.constant 0 : i32
    %c0_i32_0 = arith.constant 0 : i32
    %c0_i32_1 = arith.constant 0 : i32
    return %arg0, %c0_i32, %c0_i32_0, %arg1 : i32, i32, i32, i32
  }
  func.func @transform_1(%arg0: i32, %arg1: i32) -> (i32, i32) {
    %c0_i32 = arith.constant 0 : i32
    %c0_i32_0 = arith.constant 0 : i32
    %c0_i32_1 = arith.constant 0 : i32
    return %c0_i32, %c0_i32_0 : i32, i32
  }
  func.func @transform_2(%arg0: i32, %arg1: i32) -> (i32, i32) {
    %c0_i32 = arith.constant 0 : i32
    %c0_i32_0 = arith.constant 0 : i32
    %c0_i32_1 = arith.constant 0 : i32
    return %c0_i32, %c0_i32_0 : i32, i32
  }
  func.func @transform_3(%arg0: i32, %arg1: i32) -> (i32, i32, i32) {
    %c0_i32 = arith.constant 0 : i32
    %c0_i32_0 = arith.constant 0 : i32
    return %arg0, %c0_i32, %arg1 : i32, i32, i32
  }
  func.func @transform_4(%arg0: i32, %arg1: i32) -> (i32, i32, i32) {
    %c0_i32 = arith.constant 0 : i32
    %c0_i32_0 = arith.constant 0 : i32
    %c0_i32_1 = arith.constant 0 : i32
    return %arg0, %c0_i32, %c0_i32_0 : i32, i32, i32
  }
}

</mosaic_0001>

<llo_original>
// kernel: tpu_custom_call.1
$region0: #{tpu_custom_call.1}
  #allocation0 [shape = 'u32[]', space=smem, size = 0x4, offset = 0x4, fixed_abs, tag = 'smem constant byte address 0x4 - core index']
  #allocation1 [shape = 'u32[144,128]{1,0:T(1,128)}', space=vmem, size = 0x12000, scoped, tag = 'internal scratch']
  %s0 = inlined_call_operand.hbm [shape: f32[2,5,8,16], index: 0, kind: input, shape index: {}]
  %s1 = inlined_call_operand.vmem [shape: f32[24,8], index: 1, kind: input, shape index: {}]
  %s2 = inlined_call_operand.vmem [shape: f32[24,1], index: 2, kind: input, shape index: {}]
  %s3 = inlined_call_operand.hbm [shape: f32[2,8,16], index: 3, kind: output, shape index: {0}]
  %s4 = inlined_call_operand.vmem [shape: f32[2,8,2], index: 4, kind: output, shape index: {1}]
  %5 = xla_tuple %s3, %s4
  %s6 = sld [smem:[#allocation0]]
  $region61: #{tpu_custom_call.1} parent=0
    _
  %s8 = ssub.s32 1, %s6
  %s9 = scalar_select 0, %s8, %s6
  $region1: #{tpu_custom_call.1} parent=0
    #allocation2 [shape = 'u8[40960]{0}', space=vmem, size = 0xa000, scoped, tag = 'input window, operand 0']
    #allocation3 [shape = 's32[2]{0}', space=sflag, size = 0x8, scoped, tag = 'scoped memory for tpu_custom_call.1']
    #allocation4 [shape = 's32[2]{0}', space=sflag, size = 0x8, scoped, tag = 'scoped memory for tpu_custom_call.1']
    #allocation5 [shape = 'u8[8192]{0}', space=vmem, size = 0x2000, scoped, tag = 'output window, operand 0']
    %10 = vsyncpa [#allocation3], 0
    %s11 = scalar_lea.sflag [#allocation3], 1
    %12 = vsyncpa %s11, 0
    %13 = vsyncpa [#allocation4], 0
    %s14 = scalar_lea.sflag [#allocation4], 1
    %15 = vsyncpa %s14, 0
    loop: start=0, step=1, limit=4
    $region2: #{tpu_custom_call.1} parent=1 // loop_pre_header
      _
    $region3: #{tpu_custom_call.1} parent=1 // loop_header
      %s17 = sphi 0, %s21
      %p18 = scmp.ge.s32.totalorder %s17, 4
      %s24 = sphi 0, %s36
      %s25 = sphi 0, %s32
      %s26 = sphi 0, %s24
      %s27 = sphi 0, %s25
      %s28 = sphi 0, %s26
      %s29 = sphi 0, %s27
      %s41 = sphi 0, %s43
      %s44 = sphi 0, %s41
      %s45 = sphi 0, %s44
      %s61 = sphi 0, %s45
      %s65 = sphi 0, %s65
      %s67 = sphi 0, %s65
      %s68 = sphi 0, %s67
      %s82 = sphi 0, %s68
      %s86 = sphi 0, %s86
      %s88 = sphi 0, %s86
      %s89 = sphi 0, %s88
      %s103 = sphi 0, %s89
      %s111 = sphi 0, %s113
      %s114 = sphi 0, %s111
      %s115 = sphi 0, %s114
      %s131 = sphi 0, %s115
      %s137 = sphi 0, %s139
      %s140 = sphi 0, %s137
      %s141 = sphi 0, %s140
      %s157 = sphi 0, %s141
    $region4: #{tpu_custom_call.1} parent=1 // loop_header_branch
      %20 = sbr.rel (%p18) target = $region8
    $region5: #{tpu_custom_call.1} parent=1 // loop_body
      %s22 = ssub.s32 %s17, 1
      %s23 = ssub.s32 %s17, 2
      %s30 = sadd.s32 1, %s25
      %p31 = scmp.ge.s32.totalorder %s30, 1
      %s32 = scalar_select %p31, 0, %s30
      %s33 = sadd.s32 1, %s24
      %s34 = scalar_select %p31, %s33, %s24
      %p35 = scmp.ge.s32.totalorder %s34, 2
      %s36 = scalar_select %p35, 0, %s34
      %s37 = ssub.s32 %s24, %s36
      %s38 = ssub.s32 %s25, %s32
      %s39 = sor.u32 %s37, %s38
      %p40 = scmp.eq.s32.totalorder %s39, 0
      %s42 = sadd.s32 %s41, 1
      %s43 = scalar_select %p40, %s41, %s42
      %p46 = pneg %p40
      %p47 = scmp.eq.s32.totalorder %s17, 1
      %p48 = por %p46, %p47
      %p49 = scmp.ne.s32.totalorder %s41, %s44
      %p50 = scmp.eq.s32.totalorder %s17, 0
      %p51 = por %p49, %p50
      %p52 = scmp.ne.s32.totalorder %s41, %s44
      %p53 = scmp.eq.s32.totalorder %s22, 1
      %p54 = por %p52, %p53
      %p55 = scmp.ne.s32.totalorder %s44, %s45
      %p56 = scmp.eq.s32.totalorder %s22, 0
      %p57 = por %p55, %p56
      %p58 = scmp.ne.s32.totalorder %s44, %s45
      %p59 = scmp.eq.s32.totalorder %s23, 1
      %p60 = por %p58, %p59
      %p62 = scmp.ne.s32.totalorder %s45, %s61
      %p63 = scmp.eq.s32.totalorder %s23, 0
      %p64 = por %p62, %p63
      %s66 = sadd.s32 %s65, 1
      %p69 = scmp.eq.s32.totalorder %s17, 1
      %p70 = scmp.ne.s32.totalorder %s65, %s67
      %p71 = scmp.eq.s32.totalorder %s17, 0
      %p72 = por %p70, %p71
      %p73 = scmp.ne.s32.totalorder %s65, %s67
      %p74 = scmp.eq.s32.totalorder %s22, 1
      %p75 = por %p73, %p74
      %p76 = scmp.ne.s32.totalorder %s67, %s68
      %p77 = scmp.eq.s32.totalorder %s22, 0
      %p78 = por %p76, %p77
      %p79 = scmp.ne.s32.totalorder %s67, %s68
      %p80 = scmp.eq.s32.totalorder %s23, 1
      %p81 = por %p79, %p80
      %p83 = scmp.ne.s32.totalorder %s68, %s82
      %p84 = scmp.eq.s32.totalorder %s23, 0
      %p85 = por %p83, %p84
      %s87 = sadd.s32 %s86, 1
      %p90 = scmp.eq.s32.totalorder %s17, 1
      %p91 = scmp.ne.s32.totalorder %s86, %s88
      %p92 = scmp.eq.s32.totalorder %s17, 0
      %p93 = por %p91, %p92
      %p94 = scmp.ne.s32.totalorder %s86, %s88
      %p95 = scmp.eq.s32.totalorder %s22, 1
      %p96 = por %p94, %p95
      %p97 = scmp.ne.s32.totalorder %s88, %s89
      %p98 = scmp.eq.s32.totalorder %s22, 0
      %p99 = por %p97, %p98
      %p100 = scmp.ne.s32.totalorder %s88, %s89
      %p101 = scmp.eq.s32.totalorder %s23, 1
      %p102 = por %p100, %p101
      %p104 = scmp.ne.s32.totalorder %s89, %s103
      %p105 = scmp.eq.s32.totalorder %s23, 0
      %p106 = por %p104, %p105
      %s107 = ssub.s32 %s24, %s36
      %s108 = ssub.s32 %s25, %s32
      %s109 = sor.u32 %s107, %s108
      %p110 = scmp.eq.s32.totalorder %s109, 0
      %s112 = sadd.s32 %s111, 1
      %s113 = scalar_select %p110, %s111, %s112
      %p116 = pneg %p110
      %p117 = scmp.eq.s32.totalorder %s17, 1
      %p118 = por %p116, %p117
      %p119 = scmp.ne.s32.totalorder %s111, %s114
      %p120 = scmp.eq.s32.totalorder %s17, 0
      %p121 = por %p119, %p120
      %p122 = scmp.ne.s32.totalorder %s111, %s114
      %p123 = scmp.eq.s32.totalorder %s22, 1
      %p124 = por %p122, %p123
      %p125 = scmp.ne.s32.totalorder %s114, %s115
      %p126 = scmp.eq.s32.totalorder %s22, 0
      %p127 = por %p125, %p126
      %p128 = scmp.ne.s32.totalorder %s114, %s115
      %p129 = scmp.eq.s32.totalorder %s23, 1
      %p130 = por %p128, %p129
      %p132 = scmp.ne.s32.totalorder %s115, %s131
      %p133 = scmp.eq.s32.totalorder %s23, 0
      %p134 = por %p132, %p133
      %s135 = ssub.s32 %s24, %s36
      %p136 = scmp.eq.s32.totalorder %s135, 0
      %s138 = sadd.s32 %s137, 1
      %s139 = scalar_select %p136, %s137, %s138
      %p142 = pneg %p136
      %p143 = scmp.eq.s32.totalorder %s17, 1
      %p144 = por %p142, %p143
      %p145 = scmp.ne.s32.totalorder %s137, %s140
      %p146 = scmp.eq.s32.totalorder %s17, 0
      %p147 = por %p145, %p146
      %p148 = scmp.ne.s32.totalorder %s137, %s140
      %p149 = scmp.eq.s32.totalorder %s22, 1
      %p150 = por %p148, %p149
      %p151 = scmp.ne.s32.totalorder %s140, %s141
      %p152 = scmp.eq.s32.totalorder %s22, 0
      %p153 = por %p151, %p152
      %p154 = scmp.ne.s32.totalorder %s140, %s141
      %p155 = scmp.eq.s32.totalorder %s23, 1
      %p156 = por %p154, %p155
      %p158 = scmp.ne.s32.totalorder %s141, %s157
      %p159 = scmp.eq.s32.totalorder %s23, 0
      %p160 = por %p158, %p159
      %p161 = scmp.le.s32.totalorder 1, %s17
      %p162 = scmp.lt.s32.totalorder %s17, 3
      %p163 = pnand %p161, %p162
      %p164 = pneg %p163
      // Predicated region
      $region9: #{tpu_custom_call.1} parent=5 // pred_check
        _
      $region10: #{tpu_custom_call.1} parent=5 // pred_check_branch
        %166 = sbr.rel (%p163) target = $region12
      $region11: #{tpu_custom_call.1} parent=5 // pred_region
        %s167 = ssub.s32 %s17, 1
        // Predicated region
        $region13: #{tpu_custom_call.1} parent=11 // pred_check
          %p168 = pneg %p78
        $region14: #{tpu_custom_call.1} parent=11 // pred_check_branch
          %170 = sbr.rel (%p168) target = $region16
        $region15: #{tpu_custom_call.1} parent=11 // pred_region
          _
        $region16: #{tpu_custom_call.1} parent=11 // pred_fallthru
          _
        // Predicated region
        $region17: #{tpu_custom_call.1} parent=11 // pred_check
          %p171 = pneg %p99
        $region18: #{tpu_custom_call.1} parent=11 // pred_check_branch
          %173 = sbr.rel (%p171) target = $region20
        $region19: #{tpu_custom_call.1} parent=11 // pred_region
          _
        $region20: #{tpu_custom_call.1} parent=11 // pred_fallthru
          _
      $region12: #{tpu_custom_call.1} parent=5 // pred_fallthru
        _
      %p174 = scmp.lt.s32.totalorder %s17, 2
      // Predicated region
      $region21: #{tpu_custom_call.1} parent=5 // pred_check
        %p175 = pneg %p174
      $region22: #{tpu_custom_call.1} parent=5 // pred_check_branch
        %177 = sbr.rel (%p175) target = $region24
      $region23: #{tpu_custom_call.1} parent=5 // pred_region
        // Predicated region
        $region25: #{tpu_custom_call.1} parent=23 // pred_check
          %p178 = pneg %p51
        $region26: #{tpu_custom_call.1} parent=23 // pred_check_branch
          %180 = sbr.rel (%p178) target = $region28
        $region27: #{tpu_custom_call.1} parent=23 // pred_region
          %s181 = sand.u32 %s41, 1
          %s182 = scalar_lea.sflag [#allocation3], %s181
          %s183 = sand.u32 %s41, 1
          %s184 = smul.addr %s183, 40
          %s185 = scalar_lea.vmem [#allocation2], %s184
          %s187 = ssub.s32 640, 640
          %188 = vsyncadd %s182, %s187
          %s189 = smul.addr %s24, 5
          %s190 = sadd.s32 %s25, %s189
          %s191 = smul.addr %s190, 128
          %s192 = scalar_lea.hbm %s0, %s191
          %s193 = sshll.u32 %s185, 4
          %s194 = int_to_ptr.vmem [resolvable:$true] %s193
          %199 = dma.hbm_to_vmem [thread:$0]  %s192, 640, %s194, %s182, 128, 128, 8
        $region28: #{tpu_custom_call.1} parent=23 // pred_fallthru
          _
      $region24: #{tpu_custom_call.1} parent=5 // pred_fallthru
        _
      %p200 = scmp.le.s32.totalorder 1, %s17
      %p201 = scmp.lt.s32.totalorder %s17, 3
      %p202 = pnand %p200, %p201
      %p203 = pneg %p202
      // Predicated region
      $region29: #{tpu_custom_call.1} parent=5 // pred_check
        _
      $region30: #{tpu_custom_call.1} parent=5 // pred_check_branch
        %205 = sbr.rel (%p202) target = $region32
      $region31: #{tpu_custom_call.1} parent=5 // pred_region
        %s206 = ssub.s32 %s17, 1
        %s207 = sand.u32 %s44, 1
        %s208 = scalar_lea.sflag [#allocation3], %s207
        %s209 = sand.u32 %s44, 1
        %s210 = smul.addr %s209, 40
        %s211 = scalar_lea.vmem [#allocation2], %s210
        // Predicated region
        $region33: #{tpu_custom_call.1} parent=31 // pred_check
          %p212 = pneg %p57
        $region34: #{tpu_custom_call.1} parent=31 // pred_check_branch
          %214 = sbr.rel (%p212) target = $region36
        $region35: #{tpu_custom_call.1} parent=31 // pred_region
          %215 = dma.done %s208, 640
        $region36: #{tpu_custom_call.1} parent=31 // pred_fallthru
          _
        %s216 = sand.u32 %s44, 1
        %s217 = scalar_lea.sflag [#allocation3], %s216
        %s218 = sand.u32 %s44, 1
        %s219 = smul.addr %s218, 40
        %s220 = scalar_lea.vmem [#allocation2], %s219
        %p221 = pneg %p57
        %p222 = pneg %p54
        %p223 = pneg %p78
        %p224 = pneg %p75
        %p225 = pneg %p99
        %p226 = pneg %p96
        %p227 = pneg %p127
        %p228 = pneg %p124
        %s229 = sand.u32 %s114, 1
        %s230 = scalar_lea.sflag [#allocation4], %s229
        %s231 = sand.u32 %s114, 1
        %s232 = smul.addr %s231, 8
        %s233 = scalar_lea.vmem [#allocation5], %s232
        %p234 = pneg %p153
        %p235 = pneg %p150
        %p236 = scmp.lt.s32.totalorder %s26, 1
        %s237 = scalar_select %p236, %s26, 1
        %s238 = smul.addr %s237, 8
        %s239 = scalar_lea.vmem %s4, %s238
        %p240 = scmp.lt.s32.totalorder %s26, 1
        %s241 = scalar_select %p240, %s26, 1
        %s242 = smul.addr %s241, 8
        %s243 = scalar_lea.vmem %s4, %s242
        %v244 = vld [vmem:[%s211] sm:$0xff]
        %v245 = vld [vmem:[%s1] sm:$0xff]
        %v246 = vld [vmem:[%s1 + $0x8] sm:$0xff]
        %v247 = vld [vmem:[%s1 + $0x10] sm:$0xff]
        %v248 = vld [vmem:[%s2] sm:$0xff]
        %v249 = vld [vmem:[%s2 + $0x8] sm:$0xff]
        %v250 = vld [vmem:[%s2 + $0x10] sm:$0xff]
        %252 = vset.pattern.permute.xlu0 0
        %253 = vperm.xlu0 %252, %v248
        %v254 = vpop.permute.xlu0 %253
        %257 = vset.pattern.permute.xlu0 0
        %258 = vperm.xlu0 %257, %v249
        %v259 = vpop.permute.xlu0 %258
        %262 = vset.pattern.permute.xlu0 0
        %263 = vperm.xlu0 %262, %v250
        %v264 = vpop.permute.xlu0 %263
        %vm266 = vcmask 64512
        %v268 = vsel %vm266, %v245, 0
        %v271 = vsel %vm266, %v246, 0
        %v274 = vsel %vm266, %v247, 0
        %276 = vmatprep.subr.mxu0 0.0
        %277 = vmatpush1.msra.mxu0 0.0
        %278 = vmatprep.subr.mxu0 0.0
        %279 = vmatpush1.msra.mxu0 0.0
        %280 = vmatprep.subr.mxu0 0.0
        %281 = vmatpush1.msra.mxu0 0.0
        %282 = vmatprep.subr.mxu0 0.0
        %283 = vmatpush1.msra.mxu0 0.0
        %284 = vmatprep.subr.mxu0 0.0
        %285 = vmatpush1.msra.mxu0 0.0
        %286 = vmatprep.subr.mxu0 0.0
        %287 = vmatpush1.msra.mxu0 0.0
        %288 = vmatprep.subr.mxu0 0.0
        %289 = vmatpush1.msra.mxu0 0.0
        %290 = vmatprep.subr.mxu0 0.0
        %291 = vmatpush1.msra.mxu0 0.0
        %292 = vmatprep.subr.mxu0 0.0
        %293 = vmatpush1.msra.mxu0 0.0
        %294 = vmatprep.subr.mxu0 0.0
        %295 = vmatpush1.msra.mxu0 0.0
        %296 = vmatprep.subr.mxu0 0.0
        %297 = vmatpush1.msra.mxu0 0.0
        %298 = vmatprep.subr.mxu0 0.0
        %299 = vmatpush1.msra.mxu0 0.0
        %300 = vmatprep.subr.mxu0 0.0
        %301 = vmatpush1.msra.mxu0 0.0
        %302 = vmatprep.subr.mxu0 0.0
        %303 = vmatpush1.msra.mxu0 0.0
        %304 = vmatprep.subr.mxu0 0.0
        %305 = vmatpush1.msra.mxu0 0.0
        %306 = vmatprep.subr.mxu0 0.0
        %307 = vmatpush1.msra.mxu0 %v244
        %308 = vmatprep.subr.mxu0 0.0
        %309 = vmatpush2.msra.mxu0 0.0
        %310 = vmatprep.subr.mxu0 0.0
        %311 = vmatpush2.msra.mxu0 0.0
        %312 = vmatprep.subr.mxu0 0.0
        %313 = vmatpush2.msra.mxu0 0.0
        %314 = vmatprep.subr.mxu0 0.0
        %315 = vmatpush2.msra.mxu0 0.0
        %316 = vmatprep.subr.mxu0 0.0
        %317 = vmatpush2.msra.mxu0 0.0
        %318 = vmatprep.subr.mxu0 0.0
        %319 = vmatpush2.msra.mxu0 0.0
        %320 = vmatprep.subr.mxu0 0.0
        %321 = vmatpush2.msra.mxu0 0.0
        %322 = vmatprep.subr.mxu0 0.0
        %323 = vmatpush2.msra.mxu0 0.0
        %324 = vmatprep.subr.mxu0 0.0
        %325 = vmatpush2.msra.mxu0 0.0
        %326 = vmatprep.subr.mxu0 0.0
        %327 = vmatpush2.msra.mxu0 0.0
        %328 = vmatprep.subr.mxu0 0.0
        %329 = vmatpush2.msra.mxu0 0.0
        %330 = vmatprep.subr.mxu0 0.0
        %331 = vmatpush2.msra.mxu0 0.0
        %332 = vmatprep.subr.mxu0 0.0
        %333 = vmatpush2.msra.mxu0 0.0
        %334 = vmatprep.subr.mxu0 0.0
        %335 = vmatpush2.msra.mxu0 0.0
        %336 = vmatprep.subr.mxu0 0.0
        %337 = vmatpush2.msra.mxu0 0.0
        %338 = vmatprep.subr.mxu0 0.0
        %339 = vmatpush2.msra.mxu0 0.0
        %340 = vmatprep.mubr.f32.mxu0 0.0
        %341 = vmatmul.mubr.f32.gmra.mxu0 %v268
        %v342 = vpop.f32.mrf.mxu0
        %v343 = vadd.f32 %v254, %v342
        %v344 = vpop.f32.mrf.mxu0
        %345 = vmatprep.mubr.f32.mxu0 0.0
        %346 = vmatmul.mubr.f32.gmra.mxu0 %v271
        %v347 = vpop.f32.mrf.mxu0
        %v348 = vadd.f32 %v259, %v347
        %v349 = vpop.f32.mrf.mxu0
        %350 = vmatprep.mubr.f32.mxu0 0.0
        %351 = vmatmul.mubr.f32.gmra.mxu0 %v274
        %v352 = vpop.f32.mrf.mxu0
        %v353 = vadd.f32 %v264, %v352
        %v354 = vpop.f32.mrf.mxu0
        %355 = vdwg.mxu0
        %s356 = scalar_lea.vmem %s211, 8 [#allocation2]
        %v357 = vld [vmem:[%s356] sm:$0xff]
        %358 = vmatprep.subr.mxu0 0.0
        %359 = vmatpush1.msra.mxu0 0.0
        %360 = vmatprep.subr.mxu0 0.0
        %361 = vmatpush1.msra.mxu0 0.0
        %362 = vmatprep.subr.mxu0 0.0
        %363 = vmatpush1.msra.mxu0 0.0
        %364 = vmatprep.subr.mxu0 0.0
        %365 = vmatpush1.msra.mxu0 0.0
        %366 = vmatprep.subr.mxu0 0.0
        %367 = vmatpush1.msra.mxu0 0.0
        %368 = vmatprep.subr.mxu0 0.0
        %369 = vmatpush1.msra.mxu0 0.0
        %370 = vmatprep.subr.mxu0 0.0
        %371 = vmatpush1.msra.mxu0 0.0
        %372 = vmatprep.subr.mxu0 0.0
        %373 = vmatpush1.msra.mxu0 0.0
        %374 = vmatprep.subr.mxu0 0.0
        %375 = vmatpush1.msra.mxu0 0.0
        %376 = vmatprep.subr.mxu0 0.0
        %377 = vmatpush1.msra.mxu0 0.0
        %378 = vmatprep.subr.mxu0 0.0
        %379 = vmatpush1.msra.mxu0 0.0
        %380 = vmatprep.subr.mxu0 0.0
        %381 = vmatpush1.msra.mxu0 0.0
        %382 = vmatprep.subr.mxu0 0.0
        %383 = vmatpush1.msra.mxu0 0.0
        %384 = vmatprep.subr.mxu0 0.0
        %385 = vmatpush1.msra.mxu0 0.0
        %386 = vmatprep.subr.mxu0 0.0
        %387 = vmatpush1.msra.mxu0 0.0
        %388 = vmatprep.subr.mxu0 0.0
        %389 = vmatpush1.msra.mxu0 %v357
        %390 = vmatprep.subr.mxu0 0.0
        %391 = vmatpush2.msra.mxu0 0.0
        %392 = vmatprep.subr.mxu0 0.0
        %393 = vmatpush2.msra.mxu0 0.0
        %394 = vmatprep.subr.mxu0 0.0
        %395 = vmatpush2.msra.mxu0 0.0
        %396 = vmatprep.subr.mxu0 0.0
        %397 = vmatpush2.msra.mxu0 0.0
        %398 = vmatprep.subr.mxu0 0.0
        %399 = vmatpush2.msra.mxu0 0.0
        %400 = vmatprep.subr.mxu0 0.0
        %401 = vmatpush2.msra.mxu0 0.0
        %402 = vmatprep.subr.mxu0 0.0
        %403 = vmatpush2.msra.mxu0 0.0
        %404 = vmatprep.subr.mxu0 0.0
        %405 = vmatpush2.msra.mxu0 0.0
        %406 = vmatprep.subr.mxu0 0.0
        %407 = vmatpush2.msra.mxu0 0.0
        %408 = vmatprep.subr.mxu0 0.0
        %409 = vmatpush2.msra.mxu0 0.0
        %410 = vmatprep.subr.mxu0 0.0
        %411 = vmatpush2.msra.mxu0 0.0
        %412 = vmatprep.subr.mxu0 0.0
        %413 = vmatpush2.msra.mxu0 0.0
        %414 = vmatprep.subr.mxu0 0.0
        %415 = vmatpush2.msra.mxu0 0.0
        %416 = vmatprep.subr.mxu0 0.0
        %417 = vmatpush2.msra.mxu0 0.0
        %418 = vmatprep.subr.mxu0 0.0
        %419 = vmatpush2.msra.mxu0 0.0
        %420 = vmatprep.subr.mxu0 0.0
        %421 = vmatpush2.msra.mxu0 0.0
        %422 = vmatprep.mubr.f32.mxu0 0.0
        %423 = vmatmul.mubr.f32.gmra.mxu0 %v268
        %v424 = vpop.f32.mrf.mxu0
        %v425 = vadd.f32 %v254, %v424
        %v426 = vpop.f32.mrf.mxu0
        %427 = vmatprep.mubr.f32.mxu0 0.0
        %428 = vmatmul.mubr.f32.gmra.mxu0 %v271
        %v429 = vpop.f32.mrf.mxu0
        %v430 = vadd.f32 %v259, %v429
        %v431 = vpop.f32.mrf.mxu0
        %432 = vmatprep.mubr.f32.mxu0 0.0
        %433 = vmatmul.mubr.f32.gmra.mxu0 %v274
        %v434 = vpop.f32.mrf.mxu0
        %v435 = vadd.f32 %v264, %v434
        %v436 = vpop.f32.mrf.mxu0
        %437 = vdwg.mxu0
        %s438 = scalar_lea.vmem %s211, 16 [#allocation2]
        %v439 = vld [vmem:[%s438] sm:$0xff]
        %440 = vmatprep.subr.mxu0 0.0
        %441 = vmatpush1.msra.mxu0 0.0
        %442 = vmatprep.subr.mxu0 0.0
        %443 = vmatpush1.msra.mxu0 0.0
        %444 = vmatprep.subr.mxu0 0.0
        %445 = vmatpush1.msra.mxu0 0.0
        %446 = vmatprep.subr.mxu0 0.0
        %447 = vmatpush1.msra.mxu0 0.0
        %448 = vmatprep.subr.mxu0 0.0
        %449 = vmatpush1.msra.mxu0 0.0
        %450 = vmatprep.subr.mxu0 0.0
        %451 = vmatpush1.msra.mxu0 0.0
        %452 = vmatprep.subr.mxu0 0.0
        %453 = vmatpush1.msra.mxu0 0.0
        %454 = vmatprep.subr.mxu0 0.0
        %455 = vmatpush1.msra.mxu0 0.0
        %456 = vmatprep.subr.mxu0 0.0
        %457 = vmatpush1.msra.mxu0 0.0
        %458 = vmatprep.subr.mxu0 0.0
        %459 = vmatpush1.msra.mxu0 0.0
        %460 = vmatprep.subr.mxu0 0.0
        %461 = vmatpush1.msra.mxu0 0.0
        %462 = vmatprep.subr.mxu0 0.0
        %463 = vmatpush1.msra.mxu0 0.0
        %464 = vmatprep.subr.mxu0 0.0
        %465 = vmatpush1.msra.mxu0 0.0
        %466 = vmatprep.subr.mxu0 0.0
        %467 = vmatpush1.msra.mxu0 0.0
        %468 = vmatprep.subr.mxu0 0.0
        %469 = vmatpush1.msra.mxu0 0.0
        %470 = vmatprep.subr.mxu0 0.0
        %471 = vmatpush1.msra.mxu0 %v439
        %472 = vmatprep.subr.mxu0 0.0
        %473 = vmatpush2.msra.mxu0 0.0
        %474 = vmatprep.subr.mxu0 0.0
        %475 = vmatpush2.msra.mxu0 0.0
        %476 = vmatprep.subr.mxu0 0.0
        %477 = vmatpush2.msra.mxu0 0.0
        %478 = vmatprep.subr.mxu0 0.0
        %479 = vmatpush2.msra.mxu0 0.0
        %480 = vmatprep.subr.mxu0 0.0
        %481 = vmatpush2.msra.mxu0 0.0
        %482 = vmatprep.subr.mxu0 0.0
        %483 = vmatpush2.msra.mxu0 0.0
        %484 = vmatprep.subr.mxu0 0.0
        %485 = vmatpush2.msra.mxu0 0.0
        %486 = vmatprep.subr.mxu0 0.0
        %487 = vmatpush2.msra.mxu0 0.0
        %488 = vmatprep.subr.mxu0 0.0
        %489 = vmatpush2.msra.mxu0 0.0
        %490 = vmatprep.subr.mxu0 0.0
        %491 = vmatpush2.msra.mxu0 0.0
        %492 = vmatprep.subr.mxu0 0.0
        %493 = vmatpush2.msra.mxu0 0.0
        %494 = vmatprep.subr.mxu0 0.0
        %495 = vmatpush2.msra.mxu0 0.0
        %496 = vmatprep.subr.mxu0 0.0
        %497 = vmatpush2.msra.mxu0 0.0
        %498 = vmatprep.subr.mxu0 0.0
        %499 = vmatpush2.msra.mxu0 0.0
        %500 = vmatprep.subr.mxu0 0.0
        %501 = vmatpush2.msra.mxu0 0.0
        %502 = vmatprep.subr.mxu0 0.0
        %503 = vmatpush2.msra.mxu0 0.0
        %504 = vmatprep.mubr.f32.mxu0 0.0
        %505 = vmatmul.mubr.f32.gmra.mxu0 %v268
        %v506 = vpop.f32.mrf.mxu0
        %v507 = vadd.f32 %v254, %v506
        %v508 = vpop.f32.mrf.mxu0
        %509 = vmatprep.mubr.f32.mxu0 0.0
        %510 = vmatmul.mubr.f32.gmra.mxu0 %v271
        %v511 = vpop.f32.mrf.mxu0
        %v512 = vadd.f32 %v259, %v511
        %v513 = vpop.f32.mrf.mxu0
        %514 = vmatprep.mubr.f32.mxu0 0.0
        %515 = vmatmul.mubr.f32.gmra.mxu0 %v274
        %v516 = vpop.f32.mrf.mxu0
        %v517 = vadd.f32 %v264, %v516
        %v518 = vpop.f32.mrf.mxu0
        %519 = vdwg.mxu0
        %s520 = scalar_lea.vmem %s211, 24 [#allocation2]
        %v521 = vld [vmem:[%s520] sm:$0xff]
        %522 = vmatprep.subr.mxu0 0.0
        %523 = vmatpush1.msra.mxu0 0.0
        %524 = vmatprep.subr.mxu0 0.0
        %525 = vmatpush1.msra.mxu0 0.0
        %526 = vmatprep.subr.mxu0 0.0
        %527 = vmatpush1.msra.mxu0 0.0
        %528 = vmatprep.subr.mxu0 0.0
        %529 = vmatpush1.msra.mxu0 0.0
        %530 = vmatprep.subr.mxu0 0.0
        %531 = vmatpush1.msra.mxu0 0.0
        %532 = vmatprep.subr.mxu0 0.0
        %533 = vmatpush1.msra.mxu0 0.0
        %534 = vmatprep.subr.mxu0 0.0
        %535 = vmatpush1.msra.mxu0 0.0
        %536 = vmatprep.subr.mxu0 0.0
        %537 = vmatpush1.msra.mxu0 0.0
        %538 = vmatprep.subr.mxu0 0.0
        %539 = vmatpush1.msra.mxu0 0.0
        %540 = vmatprep.subr.mxu0 0.0
        %541 = vmatpush1.msra.mxu0 0.0
        %542 = vmatprep.subr.mxu0 0.0
        %543 = vmatpush1.msra.mxu0 0.0
        %544 = vmatprep.subr.mxu0 0.0
        %545 = vmatpush1.msra.mxu0 0.0
        %546 = vmatprep.subr.mxu0 0.0
        %547 = vmatpush1.msra.mxu0 0.0
        %548 = vmatprep.subr.mxu0 0.0
        %549 = vmatpush1.msra.mxu0 0.0
        %550 = vmatprep.subr.mxu0 0.0
        %551 = vmatpush1.msra.mxu0 0.0
        %552 = vmatprep.subr.mxu0 0.0
        %553 = vmatpush1.msra.mxu0 %v521
        %554 = vmatprep.subr.mxu0 0.0
        %555 = vmatpush2.msra.mxu0 0.0
        %556 = vmatprep.subr.mxu0 0.0
        %557 = vmatpush2.msra.mxu0 0.0
        %558 = vmatprep.subr.mxu0 0.0
        %559 = vmatpush2.msra.mxu0 0.0
        %560 = vmatprep.subr.mxu0 0.0
        %561 = vmatpush2.msra.mxu0 0.0
        %562 = vmatprep.subr.mxu0 0.0
        %563 = vmatpush2.msra.mxu0 0.0
        %564 = vmatprep.subr.mxu0 0.0
        %565 = vmatpush2.msra.mxu0 0.0
        %566 = vmatprep.subr.mxu0 0.0
        %567 = vmatpush2.msra.mxu0 0.0
        %568 = vmatprep.subr.mxu0 0.0
        %569 = vmatpush2.msra.mxu0 0.0
        %570 = vmatprep.subr.mxu0 0.0
        %571 = vmatpush2.msra.mxu0 0.0
        %572 = vmatprep.subr.mxu0 0.0
        %573 = vmatpush2.msra.mxu0 0.0
        %574 = vmatprep.subr.mxu0 0.0
        %575 = vmatpush2.msra.mxu0 0.0
        %576 = vmatprep.subr.mxu0 0.0
        %577 = vmatpush2.msra.mxu0 0.0
        %578 = vmatprep.subr.mxu0 0.0
        %579 = vmatpush2.msra.mxu0 0.0
        %580 = vmatprep.subr.mxu0 0.0
        %581 = vmatpush2.msra.mxu0 0.0
        %582 = vmatprep.subr.mxu0 0.0
        %583 = vmatpush2.msra.mxu0 0.0
        %584 = vmatprep.subr.mxu0 0.0
        %585 = vmatpush2.msra.mxu0 0.0
        %586 = vmatprep.mubr.f32.mxu0 0.0
        %587 = vmatmul.mubr.f32.gmra.mxu0 %v268
        %v588 = vpop.f32.mrf.mxu0
        %v589 = vadd.f32 %v254, %v588
        %v590 = vpop.f32.mrf.mxu0
        %591 = vmatprep.mubr.f32.mxu0 0.0
        %592 = vmatmul.mubr.f32.gmra.mxu0 %v271
        %v593 = vpop.f32.mrf.mxu0
        %v594 = vadd.f32 %v259, %v593
        %v595 = vpop.f32.mrf.mxu0
        %596 = vmatprep.mubr.f32.mxu0 0.0
        %597 = vmatmul.mubr.f32.gmra.mxu0 %v274
        %v598 = vpop.f32.mrf.mxu0
        %v599 = vadd.f32 %v264, %v598
        %v600 = vpop.f32.mrf.mxu0
        %601 = vdwg.mxu0
        %s602 = scalar_lea.vmem %s211, 32 [#allocation2]
        %v603 = vld [vmem:[%s602] sm:$0xff]
        %604 = vmatprep.subr.mxu0 0.0
        %605 = vmatpush1.msra.mxu0 0.0
        %606 = vmatprep.subr.mxu0 0.0
        %607 = vmatpush1.msra.mxu0 0.0
        %608 = vmatprep.subr.mxu0 0.0
        %609 = vmatpush1.msra.mxu0 0.0
        %610 = vmatprep.subr.mxu0 0.0
        %611 = vmatpush1.msra.mxu0 0.0
        %612 = vmatprep.subr.mxu0 0.0
        %613 = vmatpush1.msra.mxu0 0.0
        %614 = vmatprep.subr.mxu0 0.0
        %615 = vmatpush1.msra.mxu0 0.0
        %616 = vmatprep.subr.mxu0 0.0
        %617 = vmatpush1.msra.mxu0 0.0
        %618 = vmatprep.subr.mxu0 0.0
        %619 = vmatpush1.msra.mxu0 0.0
        %620 = vmatprep.subr.mxu0 0.0
        %621 = vmatpush1.msra.mxu0 0.0
        %622 = vmatprep.subr.mxu0 0.0
        %623 = vmatpush1.msra.mxu0 0.0
        %624 = vmatprep.subr.mxu0 0.0
        %625 = vmatpush1.msra.mxu0 0.0
        %626 = vmatprep.subr.mxu0 0.0
        %627 = vmatpush1.msra.mxu0 0.0
        %628 = vmatprep.subr.mxu0 0.0
        %629 = vmatpush1.msra.mxu0 0.0
        %630 = vmatprep.subr.mxu0 0.0
        %631 = vmatpush1.msra.mxu0 0.0
        %632 = vmatprep.subr.mxu0 0.0
        %633 = vmatpush1.msra.mxu0 0.0
        %634 = vmatprep.subr.mxu0 0.0
        %635 = vmatpush1.msra.mxu0 %v603
        %636 = vmatprep.subr.mxu0 0.0
        %637 = vmatpush2.msra.mxu0 0.0
        %638 = vmatprep.subr.mxu0 0.0
        %639 = vmatpush2.msra.mxu0 0.0
        %640 = vmatprep.subr.mxu0 0.0
        %641 = vmatpush2.msra.mxu0 0.0
        %642 = vmatprep.subr.mxu0 0.0
        %643 = vmatpush2.msra.mxu0 0.0
        %644 = vmatprep.subr.mxu0 0.0
        %645 = vmatpush2.msra.mxu0 0.0
        %646 = vmatprep.subr.mxu0 0.0
        %647 = vmatpush2.msra.mxu0 0.0
        %648 = vmatprep.subr.mxu0 0.0
        %649 = vmatpush2.msra.mxu0 0.0
        %650 = vmatprep.subr.mxu0 0.0
        %651 = vmatpush2.msra.mxu0 0.0
        %652 = vmatprep.subr.mxu0 0.0
        %653 = vmatpush2.msra.mxu0 0.0
        %654 = vmatprep.subr.mxu0 0.0
        %655 = vmatpush2.msra.mxu0 0.0
        %656 = vmatprep.subr.mxu0 0.0
        %657 = vmatpush2.msra.mxu0 0.0
        %658 = vmatprep.subr.mxu0 0.0
        %659 = vmatpush2.msra.mxu0 0.0
        %660 = vmatprep.subr.mxu0 0.0
        %661 = vmatpush2.msra.mxu0 0.0
        %662 = vmatprep.subr.mxu0 0.0
        %663 = vmatpush2.msra.mxu0 0.0
        %664 = vmatprep.subr.mxu0 0.0
        %665 = vmatpush2.msra.mxu0 0.0
        %666 = vmatprep.subr.mxu0 0.0
        %667 = vmatpush2.msra.mxu0 0.0
        %668 = vmatprep.mubr.f32.mxu0 0.0
        %669 = vmatmul.mubr.f32.gmra.mxu0 %v268
        %v670 = vpop.f32.mrf.mxu0
        %v671 = vadd.f32 %v254, %v670
        %v672 = vpop.f32.mrf.mxu0
        %673 = vmatprep.mubr.f32.mxu0 0.0
        %674 = vmatmul.mubr.f32.gmra.mxu0 %v271
        %v675 = vpop.f32.mrf.mxu0
        %v676 = vadd.f32 %v259, %v675
        %v677 = vpop.f32.mrf.mxu0
        %678 = vmatprep.mubr.f32.mxu0 0.0
        %679 = vmatmul.mubr.f32.gmra.mxu0 %v274
        %v680 = vpop.f32.mrf.mxu0
        %v681 = vadd.f32 %v264, %v680
        %v682 = vpop.f32.mrf.mxu0
        %683 = vdwg.mxu0
        %v684 = vmul.f32 %v343, %v348
        %vm685 = vcmask 130048
        %v686 = vsel %vm685, %v684, 0.0
        %v687 = vrot.slane %v686, 4
        %v688 = vadd.f32 %v686, %v687
        %v689 = vrot.slane %v688, 2
        %v690 = vadd.f32 %v688, %v689
        %v691 = vrot.slane %v690, 1
        %v692 = vadd.f32 %v690, %v691
        %v693 = vmul.f32 %v343, %v430
        %v694 = vsel %vm685, %v693, 0.0
        %v695 = vrot.slane %v694, 4
        %v696 = vadd.f32 %v694, %v695
        %v697 = vrot.slane %v696, 2
        %v698 = vadd.f32 %v696, %v697
        %v699 = vrot.slane %v698, 1
        %v700 = vadd.f32 %v698, %v699
        %v701 = vmul.f32 %v343, %v512
        %v702 = vsel %vm685, %v701, 0.0
        %v703 = vrot.slane %v702, 4
        %v704 = vadd.f32 %v702, %v703
        %v705 = vrot.slane %v704, 2
        %v706 = vadd.f32 %v704, %v705
        %v707 = vrot.slane %v706, 1
        %v708 = vadd.f32 %v706, %v707
        %v709 = vmul.f32 %v343, %v594
        %v710 = vsel %vm685, %v709, 0.0
        %v711 = vrot.slane %v710, 4
        %v712 = vadd.f32 %v710, %v711
        %v713 = vrot.slane %v712, 2
        %v714 = vadd.f32 %v712, %v713
        %v715 = vrot.slane %v714, 1
        %v716 = vadd.f32 %v714, %v715
        %v717 = vmul.f32 %v343, %v676
        %v718 = vsel %vm685, %v717, 0.0
        %v719 = vrot.slane %v718, 4
        %v720 = vadd.f32 %v718, %v719
        %v721 = vrot.slane %v720, 2
        %v722 = vadd.f32 %v720, %v721
        %v723 = vrot.slane %v722, 1
        %v724 = vadd.f32 %v722, %v723
        %v725 = vmax.f32 %v692, %v700
        %v726 = vmax.f32 %v725, %v708
        %v727 = vmax.f32 %v726, %v716
        %v728 = vmax.f32 %v727, %v724
        %v729 = vsub.f32 %v692, %v728
        %v730 = vmul.f32 %v729, 1.442695
        %v731 = vpow.pop %v730
        %v732 = vsub.f32 %v700, %v728
        %v733 = vmul.f32 %v732, 1.442695
        %v734 = vpow.pop %v733
        %v735 = vadd.f32 %v731, %v734
        %v736 = vsub.f32 %v708, %v728
        %v737 = vmul.f32 %v736, 1.442695
        %v738 = vpow.pop %v737
        %v739 = vadd.f32 %v735, %v738
        %v740 = vsub.f32 %v716, %v728
        %v741 = vmul.f32 %v740, 1.442695
        %v742 = vpow.pop %v741
        %v743 = vadd.f32 %v739, %v742
        %v744 = vsub.f32 %v724, %v728
        %v745 = vmul.f32 %v744, 1.442695
        %v746 = vpow.pop %v745
        %v747 = vadd.f32 %v743, %v746
        %v748 = vrcp.pop %v747
        %v749 = vmul.f32 %v731, %v748
        %v750 = vmul.f32 %v749, %v353
        %v751 = vadd.f32 %v750, 0.0
        %v752 = vmul.f32 %v425, %v348
        %v753 = vsel %vm685, %v752, 0.0
        %v754 = vrot.slane %v753, 4
        %v755 = vadd.f32 %v753, %v754
        %v756 = vrot.slane %v755, 2
        %v757 = vadd.f32 %v755, %v756
        %v758 = vrot.slane %v757, 1
        %v759 = vadd.f32 %v757, %v758
        %v760 = vmul.f32 %v425, %v430
        %v761 = vsel %vm685, %v760, 0.0
        %v762 = vrot.slane %v761, 4
        %v763 = vadd.f32 %v761, %v762
        %v764 = vrot.slane %v763, 2
        %v765 = vadd.f32 %v763, %v764
        %v766 = vrot.slane %v765, 1
        %v767 = vadd.f32 %v765, %v766
        %v768 = vmul.f32 %v425, %v512
        %v769 = vsel %vm685, %v768, 0.0
        %v770 = vrot.slane %v769, 4
        %v771 = vadd.f32 %v769, %v770
        %v772 = vrot.slane %v771, 2
        %v773 = vadd.f32 %v771, %v772
        %v774 = vrot.slane %v773, 1
        %v775 = vadd.f32 %v773, %v774
        %v776 = vmul.f32 %v425, %v594
        %v777 = vsel %vm685, %v776, 0.0
        %v778 = vrot.slane %v777, 4
        %v779 = vadd.f32 %v777, %v778
        %v780 = vrot.slane %v779, 2
        %v781 = vadd.f32 %v779, %v780
        %v782 = vrot.slane %v781, 1
        %v783 = vadd.f32 %v781, %v782
        %v784 = vmul.f32 %v425, %v676
        %v785 = vsel %vm685, %v784, 0.0
        %v786 = vrot.slane %v785, 4
        %v787 = vadd.f32 %v785, %v786
        %v788 = vrot.slane %v787, 2
        %v789 = vadd.f32 %v787, %v788
        %v790 = vrot.slane %v789, 1
        %v791 = vadd.f32 %v789, %v790
        %v792 = vmax.f32 %v759, %v767
        %v793 = vmax.f32 %v792, %v775
        %v794 = vmax.f32 %v793, %v783
        %v795 = vmax.f32 %v794, %v791
        %v796 = vsub.f32 %v759, %v795
        %v797 = vmul.f32 %v796, 1.442695
        %v798 = vpow.pop %v797
        %v799 = vsub.f32 %v767, %v795
        %v800 = vmul.f32 %v799, 1.442695
        %v801 = vpow.pop %v800
        %v802 = vadd.f32 %v798, %v801
        %v803 = vsub.f32 %v775, %v795
        %v804 = vmul.f32 %v803, 1.442695
        %v805 = vpow.pop %v804
        %v806 = vadd.f32 %v802, %v805
        %v807 = vsub.f32 %v783, %v795
        %v808 = vmul.f32 %v807, 1.442695
        %v809 = vpow.pop %v808
        %v810 = vadd.f32 %v806, %v809
        %v811 = vsub.f32 %v791, %v795
        %v812 = vmul.f32 %v811, 1.442695
        %v813 = vpow.pop %v812
        %v814 = vadd.f32 %v810, %v813
        %v815 = vrcp.pop %v814
        %v816 = vmul.f32 %v801, %v815
        %v817 = vmul.f32 %v816, %v435
        %v818 = vadd.f32 %v751, %v817
        %v819 = vmul.f32 %v507, %v348
        %v820 = vsel %vm685, %v819, 0.0
        %v821 = vrot.slane %v820, 4
        %v822 = vadd.f32 %v820, %v821
        %v823 = vrot.slane %v822, 2
        %v824 = vadd.f32 %v822, %v823
        %v825 = vrot.slane %v824, 1
        %v826 = vadd.f32 %v824, %v825
        %v827 = vmul.f32 %v507, %v430
        %v828 = vsel %vm685, %v827, 0.0
        %v829 = vrot.slane %v828, 4
        %v830 = vadd.f32 %v828, %v829
        %v831 = vrot.slane %v830, 2
        %v832 = vadd.f32 %v830, %v831
        %v833 = vrot.slane %v832, 1
        %v834 = vadd.f32 %v832, %v833
        %v835 = vmul.f32 %v507, %v512
        %v836 = vsel %vm685, %v835, 0.0
        %v837 = vrot.slane %v836, 4
        %v838 = vadd.f32 %v836, %v837
        %v839 = vrot.slane %v838, 2
        %v840 = vadd.f32 %v838, %v839
        %v841 = vrot.slane %v840, 1
        %v842 = vadd.f32 %v840, %v841
        %v843 = vmul.f32 %v507, %v594
        %v844 = vsel %vm685, %v843, 0.0
        %v845 = vrot.slane %v844, 4
        %v846 = vadd.f32 %v844, %v845
        %v847 = vrot.slane %v846, 2
        %v848 = vadd.f32 %v846, %v847
        %v849 = vrot.slane %v848, 1
        %v850 = vadd.f32 %v848, %v849
        %v851 = vmul.f32 %v507, %v676
        %v852 = vsel %vm685, %v851, 0.0
        %v853 = vrot.slane %v852, 4
        %v854 = vadd.f32 %v852, %v853
        %v855 = vrot.slane %v854, 2
        %v856 = vadd.f32 %v854, %v855
        %v857 = vrot.slane %v856, 1
        %v858 = vadd.f32 %v856, %v857
        %v859 = vmax.f32 %v826, %v834
        %v860 = vmax.f32 %v859, %v842
        %v861 = vmax.f32 %v860, %v850
        %v862 = vmax.f32 %v861, %v858
        %v863 = vsub.f32 %v826, %v862
        %v864 = vmul.f32 %v863, 1.442695
        %v865 = vpow.pop %v864
        %v866 = vsub.f32 %v834, %v862
        %v867 = vmul.f32 %v866, 1.442695
        %v868 = vpow.pop %v867
        %v869 = vadd.f32 %v865, %v868
        %v870 = vsub.f32 %v842, %v862
        %v871 = vmul.f32 %v870, 1.442695
        %v872 = vpow.pop %v871
        %v873 = vadd.f32 %v869, %v872
        %v874 = vsub.f32 %v850, %v862
        %v875 = vmul.f32 %v874, 1.442695
        %v876 = vpow.pop %v875
        %v877 = vadd.f32 %v873, %v876
        %v878 = vsub.f32 %v858, %v862
        %v879 = vmul.f32 %v878, 1.442695
        %v880 = vpow.pop %v879
        %v881 = vadd.f32 %v877, %v880
        %v882 = vrcp.pop %v881
        %v883 = vmul.f32 %v872, %v882
        %v884 = vmul.f32 %v883, %v517
        %v885 = vadd.f32 %v818, %v884
        %v886 = vmul.f32 %v589, %v348
        %v887 = vsel %vm685, %v886, 0.0
        %v888 = vrot.slane %v887, 4
        %v889 = vadd.f32 %v887, %v888
        %v890 = vrot.slane %v889, 2
        %v891 = vadd.f32 %v889, %v890
        %v892 = vrot.slane %v891, 1
        %v893 = vadd.f32 %v891, %v892
        %v894 = vmul.f32 %v589, %v430
        %v895 = vsel %vm685, %v894, 0.0
        %v896 = vrot.slane %v895, 4
        %v897 = vadd.f32 %v895, %v896
        %v898 = vrot.slane %v897, 2
        %v899 = vadd.f32 %v897, %v898
        %v900 = vrot.slane %v899, 1
        %v901 = vadd.f32 %v899, %v900
        %v902 = vmul.f32 %v589, %v512
        %v903 = vsel %vm685, %v902, 0.0
        %v904 = vrot.slane %v903, 4
        %v905 = vadd.f32 %v903, %v904
        %v906 = vrot.slane %v905, 2
        %v907 = vadd.f32 %v905, %v906
        %v908 = vrot.slane %v907, 1
        %v909 = vadd.f32 %v907, %v908
        %v910 = vmul.f32 %v589, %v594
        %v911 = vsel %vm685, %v910, 0.0
        %v912 = vrot.slane %v911, 4
        %v913 = vadd.f32 %v911, %v912
        %v914 = vrot.slane %v913, 2
        %v915 = vadd.f32 %v913, %v914
        %v916 = vrot.slane %v915, 1
        %v917 = vadd.f32 %v915, %v916
        %v918 = vmul.f32 %v589, %v676
        %v919 = vsel %vm685, %v918, 0.0
        %v920 = vrot.slane %v919, 4
        %v921 = vadd.f32 %v919, %v920
        %v922 = vrot.slane %v921, 2
        %v923 = vadd.f32 %v921, %v922
        %v924 = vrot.slane %v923, 1
        %v925 = vadd.f32 %v923, %v924
        %v926 = vmax.f32 %v893, %v901
        %v927 = vmax.f32 %v926, %v909
        %v928 = vmax.f32 %v927, %v917
        %v929 = vmax.f32 %v928, %v925
        %v930 = vsub.f32 %v893, %v929
        %v931 = vmul.f32 %v930, 1.442695
        %v932 = vpow.pop %v931
        %v933 = vsub.f32 %v901, %v929
        %v934 = vmul.f32 %v933, 1.442695
        %v935 = vpow.pop %v934
        %v936 = vadd.f32 %v932, %v935
        %v937 = vsub.f32 %v909, %v929
        %v938 = vmul.f32 %v937, 1.442695
        %v939 = vpow.pop %v938
        %v940 = vadd.f32 %v936, %v939
        %v941 = vsub.f32 %v917, %v929
        %v942 = vmul.f32 %v941, 1.442695
        %v943 = vpow.pop %v942
        %v944 = vadd.f32 %v940, %v943
        %v945 = vsub.f32 %v925, %v929
        %v946 = vmul.f32 %v945, 1.442695
        %v947 = vpow.pop %v946
        %v948 = vadd.f32 %v944, %v947
        %v949 = vrcp.pop %v948
        %v950 = vmul.f32 %v943, %v949
        %v951 = vmul.f32 %v950, %v599
        %v952 = vadd.f32 %v885, %v951
        %v953 = vmul.f32 %v671, %v348
        %v954 = vsel %vm685, %v953, 0.0
        %v955 = vrot.slane %v954, 4
        %v956 = vadd.f32 %v954, %v955
        %v957 = vrot.slane %v956, 2
        %v958 = vadd.f32 %v956, %v957
        %v959 = vrot.slane %v958, 1
        %v960 = vadd.f32 %v958, %v959
        %v961 = vmul.f32 %v671, %v430
        %v962 = vsel %vm685, %v961, 0.0
        %v963 = vrot.slane %v962, 4
        %v964 = vadd.f32 %v962, %v963
        %v965 = vrot.slane %v964, 2
        %v966 = vadd.f32 %v964, %v965
        %v967 = vrot.slane %v966, 1
        %v968 = vadd.f32 %v966, %v967
        %v969 = vmul.f32 %v671, %v512
        %v970 = vsel %vm685, %v969, 0.0
        %v971 = vrot.slane %v970, 4
        %v972 = vadd.f32 %v970, %v971
        %v973 = vrot.slane %v972, 2
        %v974 = vadd.f32 %v972, %v973
        %v975 = vrot.slane %v974, 1
        %v976 = vadd.f32 %v974, %v975
        %v977 = vmul.f32 %v671, %v594
        %v978 = vsel %vm685, %v977, 0.0
        %v979 = vrot.slane %v978, 4
        %v980 = vadd.f32 %v978, %v979
        %v981 = vrot.slane %v980, 2
        %v982 = vadd.f32 %v980, %v981
        %v983 = vrot.slane %v982, 1
        %v984 = vadd.f32 %v982, %v983
        %v985 = vmul.f32 %v671, %v676
        %v986 = vsel %vm685, %v985, 0.0
        %v987 = vrot.slane %v986, 4
        %v988 = vadd.f32 %v986, %v987
        %v989 = vrot.slane %v988, 2
        %v990 = vadd.f32 %v988, %v989
        %v991 = vrot.slane %v990, 1
        %v992 = vadd.f32 %v990, %v991
        %v993 = vmax.f32 %v960, %v968
        %v994 = vmax.f32 %v993, %v976
        %v995 = vmax.f32 %v994, %v984
        %v996 = vmax.f32 %v995, %v992
        %v997 = vsub.f32 %v960, %v996
        %v998 = vmul.f32 %v997, 1.442695
        %v999 = vpow.pop %v998
        %v1000 = vsub.f32 %v968, %v996
        %v1001 = vmul.f32 %v1000, 1.442695
        %v1002 = vpow.pop %v1001
        %v1003 = vadd.f32 %v999, %v1002
        %v1004 = vsub.f32 %v976, %v996
        %v1005 = vmul.f32 %v1004, 1.442695
        %v1006 = vpow.pop %v1005
        %v1007 = vadd.f32 %v1003, %v1006
        %v1008 = vsub.f32 %v984, %v996
        %v1009 = vmul.f32 %v1008, 1.442695
        %v1010 = vpow.pop %v1009
        %v1011 = vadd.f32 %v1007, %v1010
        %v1012 = vsub.f32 %v992, %v996
        %v1013 = vmul.f32 %v1012, 1.442695
        %v1014 = vpow.pop %v1013
        %v1015 = vadd.f32 %v1011, %v1014
        %v1016 = vrcp.pop %v1015
        %v1017 = vmul.f32 %v1014, %v1016
        %v1018 = vmul.f32 %v1017, %v681
        %v1019 = vadd.f32 %v952, %v1018
        %1020 = vst.msk [vmem:[%s233] sm:$0xff] %vm685, %v1019
        %v1021 = vsel %vm685, %v1019, 0.0
        %1022 = vadd.xlane.f32.xlu0 %v1021
        %v1023 = vpop.xlane.xlu0 %1022
        %v1024 = vmul.f32 %v1019, %v1019
        %v1025 = vsel %vm685, %v1024, 0.0
        %1026 = vadd.xlane.f32.xlu0 %v1025
        %v1027 = vpop.xlane.xlu0 %1026
        %p1028 = scmp.eq.s32.totalorder %s27, 0
        // Predicated region
        $region37: #{tpu_custom_call.1} parent=31 // pred_check
          %p1029 = pneg %p1028
        $region38: #{tpu_custom_call.1} parent=31 // pred_check_branch
          %1031 = sbr.rel (%p1029) target = $region40
        $region39: #{tpu_custom_call.1} parent=31 // pred_region
          %vm1032 = vcmask 15360
          %1033 = vst.msk [vmem:[%s243] sm:$0xff] %vm1032, 0.0
        $region40: #{tpu_custom_call.1} parent=31 // pred_fallthru
          _
        %v1034 = vld [vmem:[%s243] sm:$0xff]
        %v1035 = vadd.f32 %v1034, %v1023
        %vm1036 = vcmask 7168
        %1037 = vst.msk [vmem:[%s243] sm:$0xff] %vm1036, %v1035
        %v1038 = vld [vmem:[%s243] sm:$0xff]
        %v1039 = vadd.f32 %v1038, %v1027
        %vm1040 = vcmask 15368
        %1041 = vst.msk [vmem:[%s243] sm:$0xff] %vm1040, %v1039
        %s1042 = sand.u32 %s114, 1
        %s1043 = scalar_lea.sflag [#allocation4], %s1042
        %s1044 = sand.u32 %s114, 1
        %s1045 = smul.addr %s1044, 8
        %s1046 = scalar_lea.vmem [#allocation5], %s1045
        %p1047 = scmp.lt.s32.totalorder %s26, 1
        %s1048 = scalar_select %p1047, %s26, 1
        %s1049 = smul.addr %s1048, 8
        %s1050 = scalar_lea.vmem %s4, %s1049
        // Predicated region
        $region41: #{tpu_custom_call.1} parent=31 // pred_check
          %p1051 = pneg %p124
        $region42: #{tpu_custom_call.1} parent=31 // pred_check_branch
          %1053 = sbr.rel (%p1051) target = $region44
        $region43: #{tpu_custom_call.1} parent=31 // pred_region
          %s1055 = ssub.s32 128, 128
          %1056 = vsyncadd %s1043, %s1055
          %s1057 = sadd.s32 %s27, %s26
          %s1058 = smul.addr %s1057, 128
          %s1059 = scalar_lea.hbm %s3, %s1058
          %s1061 = sshll.u32 %s1046, 4
          %s1062 = int_to_ptr.vmem [resolvable:$true] %s1061
          %1064 = dma.vmem_to_hbm [thread:$0]  %s1062, 128, %s1059, %s1043
        $region44: #{tpu_custom_call.1} parent=31 // pred_fallthru
          _
        // Predicated region
        $region45: #{tpu_custom_call.1} parent=31 // pred_check
          %p1065 = pneg %p150
        $region46: #{tpu_custom_call.1} parent=31 // pred_check_branch
          %1067 = sbr.rel (%p1065) target = $region48
        $region47: #{tpu_custom_call.1} parent=31 // pred_region
          _
        $region48: #{tpu_custom_call.1} parent=31 // pred_fallthru
          _
      $region32: #{tpu_custom_call.1} parent=5 // pred_fallthru
        _
      %p1068 = scmp.le.s32.totalorder 2, %s17
      // Predicated region
      $region49: #{tpu_custom_call.1} parent=5 // pred_check
        %p1069 = pneg %p1068
      $region50: #{tpu_custom_call.1} parent=5 // pred_check_branch
        %1071 = sbr.rel (%p1069) target = $region52
      $region51: #{tpu_custom_call.1} parent=5 // pred_region
        %s1072 = ssub.s32 %s17, 2
        // Predicated region
        $region53: #{tpu_custom_call.1} parent=51 // pred_check
          %p1073 = pneg %p130
        $region54: #{tpu_custom_call.1} parent=51 // pred_check_branch
          %1075 = sbr.rel (%p1073) target = $region56
        $region55: #{tpu_custom_call.1} parent=51 // pred_region
          %s1076 = sand.u32 %s115, 1
          %s1077 = scalar_lea.sflag [#allocation4], %s1076
          %s1078 = sand.u32 %s115, 1
          %s1079 = smul.addr %s1078, 8
          %s1080 = scalar_lea.vmem [#allocation5], %s1079
          %1081 = dma.done %s1077, 128
        $region56: #{tpu_custom_call.1} parent=51 // pred_fallthru
          _
        // Predicated region
        $region57: #{tpu_custom_call.1} parent=51 // pred_check
          %p1082 = pneg %p156
        $region58: #{tpu_custom_call.1} parent=51 // pred_check_branch
          %1084 = sbr.rel (%p1082) target = $region60
        $region59: #{tpu_custom_call.1} parent=51 // pred_region
          %p1085 = scmp.lt.s32.totalorder %s28, 1
          %s1086 = scalar_select %p1085, %s28, 1
          %s1087 = smul.addr %s1086, 8
          %s1088 = scalar_lea.vmem %s4, %s1087
        $region60: #{tpu_custom_call.1} parent=51 // pred_fallthru
          _
      $region52: #{tpu_custom_call.1} parent=5 // pred_fallthru
        _
    $region6: #{tpu_custom_call.1} parent=1 // loop_footer
      %s21 = sadd.s32 1, %s17
    $region7: #{tpu_custom_call.1} parent=1 // loop_footer_branch
      %16 = sbr.rel target = $region3
    $region8: #{tpu_custom_call.1} parent=1 // loop_exit
      _
    %1089 = vsyncpa [#allocation3], 1
    %s1090 = scalar_lea.sflag [#allocation3], 1
    %1091 = vsyncpa %s1090, 1
    %1092 = vsyncpa [#allocation4], 1
    %s1093 = scalar_lea.sflag [#allocation4], 1
    %1094 = vsyncpa %s1093, 1

</llo_original>
